<compile_context>
chip_gen: v7x
topology: tpu7x:2x2x1
jax: 0.10.0
libtpu: 0.0.40
codegen_flags: <defaults>
</compile_context>

<pallas_src>
import functools

import jax
import jax.numpy as jnp
from jax.experimental import pallas as pl
from jax.experimental.pallas import tpu as pltpu


def _round_up(n, m):
    return ((n + m - 1) // m) * m


def _gru_kernel(len_ref, x_ref,
                w_ir_ref, w_iz_ref, w_in_ref,
                w_hr_ref, w_hz_ref, w_hn_ref,
                b_r_ref, b_z_ref, b_in_ref, b_hn_ref,
                out_ref, hid_ref, h_scratch):
    """One grid step = one time step of the GRU for one batch-row tile."""
    t = pl.program_id(1)

    @pl.when(t == 0)
    def _():
        h_scratch[...] = jnp.zeros_like(h_scratch)

    x_t = x_ref[0].astype(jnp.float32)           # (TB, D)
    h_prev = h_scratch[...]                      # (TB, H) f32 carry

    r = jax.nn.sigmoid(
        jnp.dot(x_t, w_ir_ref[...], preferred_element_type=jnp.float32)
        + jnp.dot(h_prev, w_hr_ref[...], preferred_element_type=jnp.float32)
        + b_r_ref[...])
    z = jax.nn.sigmoid(
        jnp.dot(x_t, w_iz_ref[...], preferred_element_type=jnp.float32)
        + jnp.dot(h_prev, w_hz_ref[...], preferred_element_type=jnp.float32)
        + b_z_ref[...])
    n = jnp.tanh(
        jnp.dot(x_t, w_in_ref[...], preferred_element_type=jnp.float32)
        + b_in_ref[...]
        + r * (jnp.dot(h_prev, w_hn_ref[...], preferred_element_type=jnp.float32)
               + b_hn_ref[...]))
    h_new = (1.0 - z) * n + z * h_prev

    valid = len_ref[...] > t                     # (TB, 1) bool, broadcast over H
    h_next = jnp.where(valid, h_new, h_prev)     # freeze past end of sequence
    h_scratch[...] = h_next
    out_ref[0] = jnp.where(valid, h_new, 0.0).astype(out_ref.dtype)

    @pl.when(t == pl.num_programs(1) - 1)
    def _():
        hid_ref[...] = h_next.astype(hid_ref.dtype)


def gru_forward(x, lengths, p, *, tile_b=256):
    """Masked single-layer GRU.  x: (B, T, D) -> (output (B,T,H), hidden (B,H))."""
    B, T, D = x.shape
    H = p["w_hr"].shape[0]

    # Choose a large, sublane-aligned batch tile and pad the batch to it.
    if B <= tile_b:
        tb = max(8, _round_up(B, 8))
        Bp = tb
    else:
        tb = _round_up(tile_b, 8)
        Bp = _round_up(B, tb)
    pad = Bp - B

    len_p = lengths.astype(jnp.int32)
    x_p = x
    if pad:
        x_p = jnp.pad(x, ((0, pad), (0, 0), (0, 0)))
        len_p = jnp.pad(len_p, (0, pad))
    x_tm = jnp.transpose(x_p, (1, 0, 2))          # time-major (T, Bp, D)
    len2d = len_p.reshape(Bp, 1)

    const = lambda i, t: (0, 0)                   # resident weights / biases
    grid = (Bp // tb, T)

    out_tm, hid = pl.pallas_call(
        _gru_kernel,
        out_shape=(jax.ShapeDtypeStruct((T, Bp, H), jnp.float32),
                   jax.ShapeDtypeStruct((Bp, H), jnp.float32)),
        grid_spec=pltpu.PrefetchScalarGridSpec(
            num_scalar_prefetch=0,
            grid=grid,
            in_specs=[
                pl.BlockSpec((tb, 1), lambda i, t: (i, 0)),        # lengths
                pl.BlockSpec((1, tb, D), lambda i, t: (t, i, 0)),  # x_t tile
                pl.BlockSpec((D, H), const),                       # W_ir
                pl.BlockSpec((D, H), const),                       # W_iz
                pl.BlockSpec((D, H), const),                       # W_in
                pl.BlockSpec((H, H), const),                       # W_hr
                pl.BlockSpec((H, H), const),                       # W_hz
                pl.BlockSpec((H, H), const),                       # W_hn
                pl.BlockSpec((1, H), const),                       # b_r
                pl.BlockSpec((1, H), const),                       # b_z
                pl.BlockSpec((1, H), const),                       # b_in
                pl.BlockSpec((1, H), const),                       # b_hn
            ],
            out_specs=(
                pl.BlockSpec((1, tb, H), lambda i, t: (t, i, 0)),  # full output
                pl.BlockSpec((tb, H), lambda i, t: (i, 0)),        # final hidden
            ),
            scratch_shapes=[pltpu.VMEM((tb, H), jnp.float32)],
        ),
        compiler_params=pltpu.CompilerParams(
            dimension_semantics=("parallel", "arbitrary"),
            vmem_limit_bytes=64 * 1024 * 1024),
    )(len2d, x_tm,
      p["w_ir"], p["w_iz"], p["w_in"],
      p["w_hr"], p["w_hz"], p["w_hn"],
      p["b_r"], p["b_z"], p["b_in"], p["b_hn"])

    output = jnp.transpose(out_tm[:, :B, :], (1, 0, 2))   # back to (B, T, H)
    hidden = hid[:B]
    return output, hidden


class QuestionEmbeddingPallas:
    """JAX/Pallas equivalent of QuestionEmbedding.forward (GRU path)."""

    def __init__(self, embedding_dim, hidden_dim, nlayers, bidirect, dropout,
                 rnn_type='GRU', residual=False, *, key, **arg):
        assert rnn_type == 'LSTM' or rnn_type == 'GRU'
        # TODO(synk): only GRU / nlayers==1 / unidirectional / non-residual is
        # lowered to the Pallas kernel.
        assert rnn_type == 'GRU' and nlayers == 1 and not bidirect and not residual
        self.k = 2 if bidirect else 1
        self.rnn_dim = (hidden_dim - (0 if not residual else embedding_dim)) // self.k
        self.residual = residual
        self.in_dim = embedding_dim
        self.num_hid = hidden_dim
        self.nlayers = nlayers
        self.rnn_type = rnn_type
        self.ndirections = 1 + int(bidirect)

        D, H = embedding_dim, self.rnn_dim
        stdv = 1.0 / (H ** 0.5)               # PyTorch RNN default init range
        keys = jax.random.split(key, 10)
        u = lambda kk, shape: jax.random.uniform(kk, shape, jnp.float32, -stdv, stdv)
        # Per-gate weights (gate order r, z, n).  b_r / b_z fold PyTorch's
        # (b_ih + b_hh) for those gates; b_in / b_hn stay separate because the
        # reset gate multiplies only the hidden-side candidate term.
        self.params = {
            "w_ir": u(keys[0], (D, H)), "w_iz": u(keys[1], (D, H)), "w_in": u(keys[2], (D, H)),
            "w_hr": u(keys[3], (H, H)), "w_hz": u(keys[4], (H, H)), "w_hn": u(keys[5], (H, H)),
            "b_r": u(keys[6], (1, H)), "b_z": u(keys[7], (1, H)),
            "b_in": u(keys[8], (1, H)), "b_hn": u(keys[9], (1, H)),
        }

    def __call__(self, x):
        B, T, D = x.shape
        # Reference: lengths = 14 - (x.abs().sum(2) == 0).sum(1)  (T == 14 here).
        lengths = (T - jnp.sum(jnp.sum(jnp.abs(x), axis=2) == 0, axis=1)).astype(jnp.int32)

        # Sorting + pack/unpack in the reference only reorders work; the masked
        # recurrence gives identical outputs in the original batch order.
        output, hidden = gru_forward(x, lengths, self.params)

        # q_embedding = torch.stack([output[i][len_i-1]], dim=1).squeeze()
        # (stacking along dim=1 produces an (H, B) tensor — reproduced as-is).
        idx = jnp.clip(lengths - 1, 0, T - 1)[:, None, None]
        last = jnp.take_along_axis(output, idx, axis=1)[:, 0, :]        # (B, H)
        q_embedding = jnp.squeeze(jnp.swapaxes(last, 0, 1))             # (H, B)

        # TODO(synk): the reference's `hidden[0].transpose(0,1).view(batch,-1)`
        # is written for LSTM tuples; for the GRU path we return the final
        # hidden state (B, rnn_dim) in original batch order.
        return q_embedding, hidden


def _gru_ref(x, lengths, p):
    """Pure-JAX masked-GRU reference (f32, highest precision) for validation."""
    B, T, D = x.shape
    H = p["w_hr"].shape[0]
    hp = functools.partial(jnp.dot, precision=jax.lax.Precision.HIGHEST)
    h = jnp.zeros((B, H), jnp.float32)
    outs = []
    for t in range(T):
        x_t = x[:, t, :]
        r = jax.nn.sigmoid(hp(x_t, p["w_ir"]) + hp(h, p["w_hr"]) + p["b_r"])
        z = jax.nn.sigmoid(hp(x_t, p["w_iz"]) + hp(h, p["w_hz"]) + p["b_z"])
        n = jnp.tanh(hp(x_t, p["w_in"]) + p["b_in"] + r * (hp(h, p["w_hn"]) + p["b_hn"]))
        h_new = (1.0 - z) * n + z * h
        valid = (lengths > t)[:, None]
        h = jnp.where(valid, h_new, h)
        outs.append(jnp.where(valid, h_new, 0.0))
    return jnp.stack(outs, axis=1), h


if __name__ == "__main__":
    key = jax.random.PRNGKey(0)
    k_mod, k_x = jax.random.split(key)

    B, T, D, H = 4, 14, 32, 32
    module = QuestionEmbeddingPallas(embedding_dim=D, hidden_dim=H, nlayers=1,
                                     bidirect=False, dropout=0.0,
                                     rnn_type='GRU', residual=False, key=k_mod)

    true_lengths = jnp.array([14, 9, 5, 12], dtype=jnp.int32)
    x = jax.random.normal(k_x, (B, T, D), jnp.float32)
    pos = jnp.arange(T)[None, :, None]
    x = jnp.where(pos < true_lengths[:, None, None], x, 0.0)   # zero padding rows

    q_emb, hidden = module(x)
    jax.block_until_ready((q_emb, hidden))

    # Validate against the pure-JAX reference.
    out_ref, hid_ref = _gru_ref(x, true_lengths, module.params)
    idx = jnp.clip(true_lengths - 1, 0, T - 1)[:, None, None]
    last_ref = jnp.take_along_axis(out_ref, idx, axis=1)[:, 0, :]
    q_ref = jnp.squeeze(jnp.swapaxes(last_ref, 0, 1))

    assert q_emb.shape == (H, B), q_emb.shape
    assert hidden.shape == (B, H), hidden.shape
    assert jnp.allclose(hidden, hid_ref, atol=1e-4, rtol=1e-4)
    assert jnp.allclose(q_emb, q_ref, atol=1e-4, rtol=1e-4)

    print("KERNEL_OK")
</pallas_src>

<mosaic_0001>
module attributes {stable_mosaic.version = 11 : i64} {
  func.func @_gru_kernel(%arg0: i32, %arg1: i32, %arg2: memref<8x1xi32, #tpu.memory_space<vmem>>, %arg3: memref<1x8x32xf32, #tpu.memory_space<vmem>>, %arg4: memref<32x32xf32, #tpu.memory_space<vmem>>, %arg5: memref<32x32xf32, #tpu.memory_space<vmem>>, %arg6: memref<32x32xf32, #tpu.memory_space<vmem>>, %arg7: memref<32x32xf32, #tpu.memory_space<vmem>>, %arg8: memref<32x32xf32, #tpu.memory_space<vmem>>, %arg9: memref<32x32xf32, #tpu.memory_space<vmem>>, %arg10: memref<1x32xf32, #tpu.memory_space<vmem>>, %arg11: memref<1x32xf32, #tpu.memory_space<vmem>>, %arg12: memref<1x32xf32, #tpu.memory_space<vmem>>, %arg13: memref<1x32xf32, #tpu.memory_space<vmem>>, %arg14: memref<1x8x32xf32, #tpu.memory_space<vmem>>, %arg15: memref<8x32xf32, #tpu.memory_space<vmem>>, %arg16: memref<8x32xf32, #tpu.memory_space<vmem>>) attributes {dimension_semantics = [#tpu.dimension_semantics<parallel>, #tpu.dimension_semantics<arbitrary>], iteration_bounds = array<i64: 1, 14>, scalar_prefetch = 0 : i64, scratch_operands = 1 : i64, tpu.core_type = #tpu.core_type<tc>, window_params = [{transform_indices = @transform_0, window_bounds = array<i64: 8, 1>}, {transform_indices = @transform_1, window_bounds = array<i64: 1, 8, 32>}, {pipeline_mode = #tpu.pipeline_mode<synchronous>, transform_indices = @transform_2, window_bounds = array<i64: 32, 32>}, {pipeline_mode = #tpu.pipeline_mode<synchronous>, transform_indices = @transform_3, window_bounds = array<i64: 32, 32>}, {pipeline_mode = #tpu.pipeline_mode<synchronous>, transform_indices = @transform_4, window_bounds = array<i64: 32, 32>}, {pipeline_mode = #tpu.pipeline_mode<synchronous>, transform_indices = @transform_5, window_bounds = array<i64: 32, 32>}, {pipeline_mode = #tpu.pipeline_mode<synchronous>, transform_indices = @transform_6, window_bounds = array<i64: 32, 32>}, {pipeline_mode = #tpu.pipeline_mode<synchronous>, transform_indices = @transform_7, window_bounds = array<i64: 32, 32>}, {pipeline_mode = #tpu.pipeline_mode<synchronous>, transform_indices = @transform_8, window_bounds = array<i64: 1, 32>}, {pipeline_mode = #tpu.pipeline_mode<synchronous>, transform_indices = @transform_9, window_bounds = array<i64: 1, 32>}, {pipeline_mode = #tpu.pipeline_mode<synchronous>, transform_indices = @transform_10, window_bounds = array<i64: 1, 32>}, {pipeline_mode = #tpu.pipeline_mode<synchronous>, transform_indices = @transform_11, window_bounds = array<i64: 1, 32>}, {transform_indices = @transform_12, window_bounds = array<i64: 1, 8, 32>}, {transform_indices = @transform_13, window_bounds = array<i64: 8, 32>}]} {
    %c0_i32 = arith.constant 0 : i32
    %0 = arith.cmpi eq, %arg1, %c0_i32 : i32
    %1 = arith.extui %0 : i1 to i32
    %c0_i32_0 = arith.constant 0 : i32
    %2 = arith.cmpi ne, %1, %c0_i32_0 : i32
    scf.if %2 {
      %cst_42 = arith.constant 0.000000e+00 : f32
      %67 = vector.broadcast %cst_42 : f32 to vector<8x32xf32>
      %c0_43 = arith.constant 0 : index
      %c0_44 = arith.constant 0 : index
      %68 = vector.load %arg16[%c0_43, %c0_44] : memref<8x32xf32, #tpu.memory_space<vmem>>, vector<8x32xf32>
      tpu.vector_store %arg16[%c0_43, %c0_44], %67 {strides = array<i32>} : memref<8x32xf32, #tpu.memory_space<vmem>>, vector<8x32xf32>,
    } else {
    }
    %c0 = arith.constant 0 : index
    %c0_1 = arith.constant 0 : index
    %c0_2 = arith.constant 0 : index
    %3 = vector.load %arg3[%c0, %c0_1, %c0_2] : memref<1x8x32xf32, #tpu.memory_space<vmem>>, vector<1x8x32xf32>
    %4 = vector.shape_cast %3 : vector<1x8x32xf32> to vector<8x32xf32>
    %c0_3 = arith.constant 0 : index
    %c0_4 = arith.constant 0 : index
    %5 = vector.load %arg16[%c0_3, %c0_4] : memref<8x32xf32, #tpu.memory_space<vmem>>, vector<8x32xf32>
    %c0_5 = arith.constant 0 : index
    %c0_6 = arith.constant 0 : index
    %6 = vector.load %arg4[%c0_5, %c0_6] : memref<32x32xf32, #tpu.memory_space<vmem>>, vector<32x32xf32>
    %cst = arith.constant dense<0.000000e+00> : vector<8x32xf32>
    %7 = tpu.matmul %4, %6, %cst {dimension_numbers = #tpu.dot_dimension_numbers<[1], [0], [0], [1], [0, 0, 1, 1], [], []>} : vector<8x32xf32>, vector<32x32xf32>, vector<8x32xf32> -> vector<8x32xf32>
    %c0_7 = arith.constant 0 : index
    %c0_8 = arith.constant 0 : index
    %8 = vector.load %arg7[%c0_7, %c0_8] : memref<32x32xf32, #tpu.memory_space<vmem>>, vector<32x32xf32>
    %cst_9 = arith.constant dense<0.000000e+00> : vector<8x32xf32>
    %9 = tpu.matmul %5, %8, %cst_9 {dimension_numbers = #tpu.dot_dimension_numbers<[1], [0], [0], [1], [0, 0, 1, 1], [], []>} : vector<8x32xf32>, vector<32x32xf32>, vector<8x32xf32> -> vector<8x32xf32>
    %10 = arith.addf %7, %9 : vector<8x32xf32>
    %c0_10 = arith.constant 0 : index
    %c0_11 = arith.constant 0 : index
    %11 = vector.load %arg10[%c0_10, %c0_11] : memref<1x32xf32, #tpu.memory_space<vmem>>, vector<1x32xf32>
    %12 = vector.broadcast %11 : vector<1x32xf32> to vector<8x32xf32>
    %13 = arith.addf %10, %12 : vector<8x32xf32>
    %14 = arith.negf %13 : vector<8x32xf32>
    %15 = math.exp %14 : vector<8x32xf32>
    %cst_12 = arith.constant 1.000000e+00 : f32
    %16 = vector.broadcast %cst_12 : f32 to vector<8x32xf32>
    %17 = arith.addf %16, %15 : vector<8x32xf32>
    %18 = arith.divf %16, %17 : vector<8x32xf32>
    %c0_13 = arith.constant 0 : index
    %c0_14 = arith.constant 0 : index
    %19 = vector.load %arg5[%c0_13, %c0_14] : memref<32x32xf32, #tpu.memory_space<vmem>>, vector<32x32xf32>
    %cst_15 = arith.constant dense<0.000000e+00> : vector<8x32xf32>
    %20 = tpu.matmul %4, %19, %cst_15 {dimension_numbers = #tpu.dot_dimension_numbers<[1], [0], [0], [1], [0, 0, 1, 1], [], []>} : vector<8x32xf32>, vector<32x32xf32>, vector<8x32xf32> -> vector<8x32xf32>
    %c0_16 = arith.constant 0 : index
    %c0_17 = arith.constant 0 : index
    %21 = vector.load %arg8[%c0_16, %c0_17] : memref<32x32xf32, #tpu.memory_space<vmem>>, vector<32x32xf32>
    %cst_18 = arith.constant dense<0.000000e+00> : vector<8x32xf32>
    %22 = tpu.matmul %5, %21, %cst_18 {dimension_numbers = #tpu.dot_dimension_numbers<[1], [0], [0], [1], [0, 0, 1, 1], [], []>} : vector<8x32xf32>, vector<32x32xf32>, vector<8x32xf32> -> vector<8x32xf32>
    %23 = arith.addf %20, %22 : vector<8x32xf32>
    %c0_19 = arith.constant 0 : index
    %c0_20 = arith.constant 0 : index
    %24 = vector.load %arg11[%c0_19, %c0_20] : memref<1x32xf32, #tpu.memory_space<vmem>>, vector<1x32xf32>
    %25 = vector.broadcast %24 : vector<1x32xf32> to vector<8x32xf32>
    %26 = arith.addf %23, %25 : vector<8x32xf32>
    %27 = arith.negf %26 : vector<8x32xf32>
    %28 = math.exp %27 : vector<8x32xf32>
    %cst_21 = arith.constant 1.000000e+00 : f32
    %29 = vector.broadcast %cst_21 : f32 to vector<8x32xf32>
    %30 = arith.addf %29, %28 : vector<8x32xf32>
    %31 = arith.divf %29, %30 : vector<8x32xf32>
    %c0_22 = arith.constant 0 : index
    %c0_23 = arith.constant 0 : index
    %32 = vector.load %arg6[%c0_22, %c0_23] : memref<32x32xf32, #tpu.memory_space<vmem>>, vector<32x32xf32>
    %cst_24 = arith.constant dense<0.000000e+00> : vector<8x32xf32>
    %33 = tpu.matmul %4, %32, %cst_24 {dimension_numbers = #tpu.dot_dimension_numbers<[1], [0], [0], [1], [0, 0, 1, 1], [], []>} : vector<8x32xf32>, vector<32x32xf32>, vector<8x32xf32> -> vector<8x32xf32>
    %c0_25 = arith.constant 0 : index
    %c0_26 = arith.constant 0 : index
    %34 = vector.load %arg12[%c0_25, %c0_26] : memref<1x32xf32, #tpu.memory_space<vmem>>, vector<1x32xf32>
    %35 = vector.broadcast %34 : vector<1x32xf32> to vector<8x32xf32>
    %36 = arith.addf %33, %35 : vector<8x32xf32>
    %c0_27 = arith.constant 0 : index
    %c0_28 = arith.constant 0 : index
    %37 = vector.load %arg9[%c0_27, %c0_28] : memref<32x32xf32, #tpu.memory_space<vmem>>, vector<32x32xf32>
    %cst_29 = arith.constant dense<0.000000e+00> : vector<8x32xf32>
    %38 = tpu.matmul %5, %37, %cst_29 {dimension_numbers = #tpu.dot_dimension_numbers<[1], [0], [0], [1], [0, 0, 1, 1], [], []>} : vector<8x32xf32>, vector<32x32xf32>, vector<8x32xf32> -> vector<8x32xf32>
    %c0_30 = arith.constant 0 : index
    %c0_31 = arith.constant 0 : index
    %39 = vector.load %arg13[%c0_30, %c0_31] : memref<1x32xf32, #tpu.memory_space<vmem>>, vector<1x32xf32>
    %40 = vector.broadcast %39 : vector<1x32xf32> to vector<8x32xf32>
    %41 = arith.addf %38, %40 : vector<8x32xf32>
    %42 = arith.mulf %18, %41 : vector<8x32xf32>
    %43 = arith.addf %36, %42 : vector<8x32xf32>
    %44 = math.tanh %43 : vector<8x32xf32>
    %cst_32 = arith.constant 1.000000e+00 : f32
    %45 = vector.broadcast %cst_32 : f32 to vector<8x32xf32>
    %46 = arith.subf %45, %31 : vector<8x32xf32>
    %47 = arith.mulf %46, %44 : vector<8x32xf32>
    %48 = arith.mulf %31, %5 : vector<8x32xf32>
    %49 = arith.addf %47, %48 : vector<8x32xf32>
    %c0_33 = arith.constant 0 : index
    %c0_34 = arith.constant 0 : index
    %50 = vector.load %arg2[%c0_33, %c0_34] : memref<8x1xi32, #tpu.memory_space<vmem>>, vector<8x1xi32>
    %51 = vector.broadcast %arg1 : i32 to vector<8x1xi32>
    %52 = arith.cmpi sgt, %50, %51 : vector<8x1xi32>
    %53 = vector.shape_cast %52 : vector<8x1xi1> to vector<8x1xi1>
    %54 = vector.broadcast %53 : vector<8x1xi1> to vector<8x32xi1>
    %55 = arith.select %54, %49, %5 : vector<8x32xi1>, vector<8x32xf32>
    %c0_35 = arith.constant 0 : index
    %c0_36 = arith.constant 0 : index
    %56 = vector.load %arg16[%c0_35, %c0_36] : memref<8x32xf32, #tpu.memory_space<vmem>>, vector<8x32xf32>
    tpu.vector_store %arg16[%c0_35, %c0_36], %55 {strides = array<i32>} : memref<8x32xf32, #tpu.memory_space<vmem>>, vector<8x32xf32>,
    %cst_37 = arith.constant 0.000000e+00 : f32
    %57 = vector.shape_cast %52 : vector<8x1xi1> to vector<8x1xi1>
    %58 = vector.broadcast %57 : vector<8x1xi1> to vector<8x32xi1>
    %59 = vector.broadcast %cst_37 : f32 to vector<8x32xf32>
    %60 = arith.select %58, %49, %59 : vector<8x32xi1>, vector<8x32xf32>
    %c0_38 = arith.constant 0 : index
    %c0_39 = arith.constant 0 : index
    %c0_40 = arith.constant 0 : index
    %61 = vector.load %arg14[%c0_38, %c0_39, %c0_40] : memref<1x8x32xf32, #tpu.memory_space<vmem>>, vector<1x8x32xf32>
    %62 = vector.shape_cast %61 : vector<1x8x32xf32> to vector<8x32xf32>
    %63 = vector.shape_cast %60 : vector<8x32xf32> to vector<1x8x32xf32>
    tpu.vector_store %arg14[%c0_38, %c0_39, %c0_40], %63 {strides = array<i32>} : memref<1x8x32xf32, #tpu.memory_space<vmem>>, vector<1x8x32xf32>,
    %c13_i32 = arith.constant 13 : i32
    %64 = arith.cmpi eq, %arg1, %c13_i32 : i32
    %65 = arith.extui %64 : i1 to i32
    %c0_i32_41 = arith.constant 0 : i32
    %66 = arith.cmpi ne, %65, %c0_i32_41 : i32
    scf.if %66 {
      %c0_42 = arith.constant 0 : index
      %c0_43 = arith.constant 0 : index
      %67 = vector.load %arg15[%c0_42, %c0_43] : memref<8x32xf32, #tpu.memory_space<vmem>>, vector<8x32xf32>
      tpu.vector_store %arg15[%c0_42, %c0_43], %55 {strides = array<i32>} : memref<8x32xf32, #tpu.memory_space<vmem>>, vector<8x32xf32>,
    } else {
    }
    return
  }
  func.func @transform_0(%arg0: i32, %arg1: i32) -> (i32, i32) {
    %c0_i32 = arith.constant 0 : i32
    %c0_i32_0 = arith.constant 0 : i32
    return %arg0, %c0_i32 : i32, i32
  }
  func.func @transform_1(%arg0: i32, %arg1: i32) -> (i32, i32, i32) {
    %c0_i32 = arith.constant 0 : i32
    %c0_i32_0 = arith.constant 0 : i32
    return %arg1, %arg0, %c0_i32 : i32, i32, i32
  }
  func.func @transform_2(%arg0: i32, %arg1: i32) -> (i32, i32) {
    %c0_i32 = arith.constant 0 : i32
    %c0_i32_0 = arith.constant 0 : i32
    %c0_i32_1 = arith.constant 0 : i32
    return %c0_i32, %c0_i32_0 : i32, i32
  }
  func.func @transform_3(%arg0: i32, %arg1: i32) -> (i32, i32) {
    %c0_i32 = arith.constant 0 : i32
    %c0_i32_0 = arith.constant 0 : i32
    %c0_i32_1 = arith.constant 0 : i32
    return %c0_i32, %c0_i32_0 : i32, i32
  }
  func.func @transform_4(%arg0: i32, %arg1: i32) -> (i32, i32) {
    %c0_i32 = arith.constant 0 : i32
    %c0_i32_0 = arith.constant 0 : i32
    %c0_i32_1 = arith.constant 0 : i32
    return %c0_i32, %c0_i32_0 : i32, i32
  }
  func.func @transform_5(%arg0: i32, %arg1: i32) -> (i32, i32) {
    %c0_i32 = arith.constant 0 : i32
    %c0_i32_0 = arith.constant 0 : i32
    %c0_i32_1 = arith.constant 0 : i32
    return %c0_i32, %c0_i32_0 : i32, i32
  }
  func.func @transform_6(%arg0: i32, %arg1: i32) -> (i32, i32) {
    %c0_i32 = arith.constant 0 : i32
    %c0_i32_0 = arith.constant 0 : i32
    %c0_i32_1 = arith.constant 0 : i32
    return %c0_i32, %c0_i32_0 : i32, i32
  }
  func.func @transform_7(%arg0: i32, %arg1: i32) -> (i32, i32) {
    %c0_i32 = arith.constant 0 : i32
    %c0_i32_0 = arith.constant 0 : i32
    %c0_i32_1 = arith.constant 0 : i32
    return %c0_i32, %c0_i32_0 : i32, i32
  }
  func.func @transform_8(%arg0: i32, %arg1: i32) -> (i32, i32) {
    %c0_i32 = arith.constant 0 : i32
    %c0_i32_0 = arith.constant 0 : i32
    %c0_i32_1 = arith.constant 0 : i32
    return %c0_i32, %c0_i32_0 : i32, i32
  }
  func.func @transform_9(%arg0: i32, %arg1: i32) -> (i32, i32) {
    %c0_i32 = arith.constant 0 : i32
    %c0_i32_0 = arith.constant 0 : i32
    %c0_i32_1 = arith.constant 0 : i32
    return %c0_i32, %c0_i32_0 : i32, i32
  }
  func.func @transform_10(%arg0: i32, %arg1: i32) -> (i32, i32) {
    %c0_i32 = arith.constant 0 : i32
    %c0_i32_0 = arith.constant 0 : i32
    %c0_i32_1 = arith.constant 0 : i32
    return %c0_i32, %c0_i32_0 : i32, i32
  }
  func.func @transform_11(%arg0: i32, %arg1: i32) -> (i32, i32) {
    %c0_i32 = arith.constant 0 : i32
    %c0_i32_0 = arith.constant 0 : i32
    %c0_i32_1 = arith.constant 0 : i32
    return %c0_i32, %c0_i32_0 : i32, i32
  }
  func.func @transform_12(%arg0: i32, %arg1: i32) -> (i32, i32, i32) {
    %c0_i32 = arith.constant 0 : i32
    %c0_i32_0 = arith.constant 0 : i32
    return %arg1, %arg0, %c0_i32 : i32, i32, i32
  }
  func.func @transform_13(%arg0: i32, %arg1: i32) -> (i32, i32) {
    %c0_i32 = arith.constant 0 : i32
    %c0_i32_0 = arith.constant 0 : i32
    return %arg0, %c0_i32 : i32, i32
  }
}

</mosaic_0001>

<llo_original>
// kernel: tpu_custom_call.1
$region0: #{tpu_custom_call.1}
  #allocation0 [shape = 'u32[]', space=smem, size = 0x4, offset = 0x4, fixed_abs, tag = 'smem constant byte address 0x4 - core index']
  #allocation1 [shape = 'u32[144,128]{1,0:T(1,128)}', space=vmem, size = 0x12000, scoped, tag = 'internal scratch']
  #allocation2 [shape = 'f32[8,32]{1,0:T(8,128)}', space=vmem, size = 0x1000, scoped, tag = 'scratch operand']
  %s0 = inlined_call_operand.hbm [shape: s32[8,1], index: 0, kind: input, shape index: {}]
  %s1 = inlined_call_operand.hbm [shape: f32[14,8,32], index: 1, kind: input, shape index: {}]
  %s2 = inlined_call_operand.hbm [shape: f32[32,32], index: 2, kind: input, shape index: {}]
  %s3 = inlined_call_operand.hbm [shape: f32[32,32], index: 3, kind: input, shape index: {}]
  %s4 = inlined_call_operand.hbm [shape: f32[32,32], index: 4, kind: input, shape index: {}]
  %s5 = inlined_call_operand.hbm [shape: f32[32,32], index: 5, kind: input, shape index: {}]
  %s6 = inlined_call_operand.hbm [shape: f32[32,32], index: 6, kind: input, shape index: {}]
  %s7 = inlined_call_operand.hbm [shape: f32[32,32], index: 7, kind: input, shape index: {}]
  %s8 = inlined_call_operand.hbm [shape: f32[1,32], index: 8, kind: input, shape index: {}]
  %s9 = inlined_call_operand.hbm [shape: f32[1,32], index: 9, kind: input, shape index: {}]
  %s10 = inlined_call_operand.hbm [shape: f32[1,32], index: 10, kind: input, shape index: {}]
  %s11 = inlined_call_operand.hbm [shape: f32[1,32], index: 11, kind: input, shape index: {}]
  %s12 = inlined_call_operand.hbm [shape: f32[14,8,32], index: 12, kind: output, shape index: {0}]
  %s13 = inlined_call_operand.hbm [shape: f32[8,32], index: 13, kind: output, shape index: {1}]
  %14 = xla_tuple %s12, %s13
  %s15 = sld [smem:[#allocation0]]
  $region145: #{tpu_custom_call.1} parent=0
    _
  %s17 = ssub.s32 1, %s15
  %s18 = scalar_select 0, %s17, %s15
  $region1: #{tpu_custom_call.1} parent=0
    #allocation3 [shape = 'u8[4096]{0}', space=vmem, size = 0x1000, scoped, tag = 'input window, operand 0, single buffered']
    #allocation4 [shape = 's32[2]{0}', space=sflag, size = 0x8, scoped, tag = 'scoped memory for tpu_custom_call.1']
    #allocation5 [shape = 's32[2]{0}', space=sflag, size = 0x8, scoped, tag = 'scoped memory for tpu_custom_call.1']
    #allocation6 [shape = 'u8[8192]{0}', space=vmem, size = 0x2000, scoped, tag = 'input window, operand 1']
    #allocation7 [shape = 's32[2]{0}', space=sflag, size = 0x8, scoped, tag = 'scoped memory for tpu_custom_call.1']
    #allocation8 [shape = 'u8[16384]{0}', space=vmem, size = 0x4000, scoped, tag = 'input window, operand 2, single buffered']
    #allocation9 [shape = 'u8[16384]{0}', space=vmem, size = 0x4000, scoped, tag = 'input window, operand 3, single buffered']
    #allocation10 [shape = 's32[1]{0}', space=sflag, size = 0x4, scoped, tag = 'scoped memory for tpu_custom_call.1']
    #allocation11 [shape = 'u8[16384]{0}', space=vmem, size = 0x4000, scoped, tag = 'input window, operand 4, single buffered']
    #allocation12 [shape = 'u8[16384]{0}', space=vmem, size = 0x4000, scoped, tag = 'input window, operand 5, single buffered']
    #allocation13 [shape = 's32[1]{0}', space=sflag, size = 0x4, scoped, tag = 'scoped memory for tpu_custom_call.1']
    #allocation14 [shape = 'u8[16384]{0}', space=vmem, size = 0x4000, scoped, tag = 'input window, operand 6, single buffered']
    #allocation15 [shape = 'u8[16384]{0}', space=vmem, size = 0x4000, scoped, tag = 'input window, operand 7, single buffered']
    #allocation16 [shape = 's32[1]{0}', space=sflag, size = 0x4, scoped, tag = 'scoped memory for tpu_custom_call.1']
    #allocation17 [shape = 'u8[512]{0}', space=vmem, size = 0x400, scoped, tag = 'input window, operand 8, single buffered']
    #allocation18 [shape = 'u8[512]{0}', space=vmem, size = 0x400, scoped, tag = 'input window, operand 9, single buffered']
    #allocation19 [shape = 's32[1]{0}', space=sflag, size = 0x4, scoped, tag = 'scoped memory for tpu_custom_call.1']
    #allocation20 [shape = 'u8[512]{0}', space=vmem, size = 0x400, scoped, tag = 'input window, operand 10, single buffered']
    #allocation21 [shape = 'u8[512]{0}', space=vmem, size = 0x400, scoped, tag = 'input window, operand 11, single buffered']
    #allocation22 [shape = 's32[1]{0}', space=sflag, size = 0x4, scoped, tag = 'scoped memory for tpu_custom_call.1']
    #allocation23 [shape = 'u8[8192]{0}', space=vmem, size = 0x2000, scoped, tag = 'output window, operand 0']
    #allocation24 [shape = 'u8[4096]{0}', space=vmem, size = 0x1000, scoped, tag = 'output window, operand 1, single buffered']
    #allocation25 [shape = 's32[1]{0}', space=sflag, size = 0x4, scoped, tag = 'scoped memory for tpu_custom_call.1']
    %19 = vsyncpa [#allocation4], 0
    %20 = vsyncpa [#allocation7], 0
    %s21 = scalar_lea.sflag [#allocation7], 1
    %22 = vsyncpa %s21, 0
    %23 = vsyncpa [#allocation10], 0
    %24 = vsyncpa [#allocation13], 0
    %25 = vsyncpa [#allocation16], 0
    %26 = vsyncpa [#allocation19], 0
    %27 = vsyncpa [#allocation22], 0
    %28 = vsyncpa [#allocation5], 0
    %s29 = scalar_lea.sflag [#allocation5], 1
    %30 = vsyncpa %s29, 0
    %31 = vsyncpa [#allocation25], 0
    loop: start=0, step=1, limit=16
    $region2: #{tpu_custom_call.1} parent=1 // loop_pre_header
      _
    $region3: #{tpu_custom_call.1} parent=1 // loop_header
      %s33 = sphi 0, %s37
      %p34 = scmp.ge.s32.totalorder %s33, 16
      %s40 = sphi 0, %s52
      %s41 = sphi 0, %s48
      %s42 = sphi 0, %s40
      %s43 = sphi 0, %s41
      %s44 = sphi 0, %s42
      %s45 = sphi 0, %s43
      %s55 = sphi 0, %s57
      %s58 = sphi 0, %s55
      %s59 = sphi 0, %s58
      %s75 = sphi 0, %s59
      %s83 = sphi 0, %s85
      %s86 = sphi 0, %s83
      %s87 = sphi 0, %s86
      %s103 = sphi 0, %s87
      %s107 = sphi 0, %s107
      %s109 = sphi 0, %s107
      %s110 = sphi 0, %s109
      %s124 = sphi 0, %s110
      %s128 = sphi 0, %s128
      %s130 = sphi 0, %s128
      %s131 = sphi 0, %s130
      %s145 = sphi 0, %s131
      %s149 = sphi 0, %s149
      %s151 = sphi 0, %s149
      %s152 = sphi 0, %s151
      %s166 = sphi 0, %s152
      %s170 = sphi 0, %s170
      %s172 = sphi 0, %s170
      %s173 = sphi 0, %s172
      %s187 = sphi 0, %s173
      %s191 = sphi 0, %s191
      %s193 = sphi 0, %s191
      %s194 = sphi 0, %s193
      %s208 = sphi 0, %s194
      %s212 = sphi 0, %s212
      %s214 = sphi 0, %s212
      %s215 = sphi 0, %s214
      %s229 = sphi 0, %s215
      %s233 = sphi 0, %s233
      %s235 = sphi 0, %s233
      %s236 = sphi 0, %s235
      %s250 = sphi 0, %s236
      %s254 = sphi 0, %s254
      %s256 = sphi 0, %s254
      %s257 = sphi 0, %s256
      %s271 = sphi 0, %s257
      %s275 = sphi 0, %s275
      %s277 = sphi 0, %s275
      %s278 = sphi 0, %s277
      %s292 = sphi 0, %s278
      %s296 = sphi 0, %s296
      %s298 = sphi 0, %s296
      %s299 = sphi 0, %s298
      %s313 = sphi 0, %s299
      %s321 = sphi 0, %s323
      %s324 = sphi 0, %s321
      %s325 = sphi 0, %s324
      %s341 = sphi 0, %s325
      %s347 = sphi 0, %s349
      %s350 = sphi 0, %s347
      %s351 = sphi 0, %s350
      %s367 = sphi 0, %s351
    $region4: #{tpu_custom_call.1} parent=1 // loop_header_branch
      %36 = sbr.rel (%p34) target = $region8
    $region5: #{tpu_custom_call.1} parent=1 // loop_body
      %s38 = ssub.s32 %s33, 1
      %s39 = ssub.s32 %s33, 2
      %s46 = sadd.s32 1, %s41
      %p47 = scmp.ge.s32.totalorder %s46, 14
      %s48 = scalar_select %p47, 0, %s46
      %s49 = sadd.s32 1, %s40
      %s50 = scalar_select %p47, %s49, %s40
      %p51 = scmp.ge.s32.totalorder %s50, 1
      %s52 = scalar_select %p51, 0, %s50
      %s53 = ssub.s32 %s40, %s52
      %p54 = scmp.eq.s32.totalorder %s53, 0
      %s56 = sadd.s32 %s55, 1
      %s57 = scalar_select %p54, %s55, %s56
      %p60 = pneg %p54
      %p61 = scmp.eq.s32.totalorder %s33, 13
      %p62 = por %p60, %p61
      %p63 = scmp.ne.s32.totalorder %s55, %s58
      %p64 = scmp.eq.s32.totalorder %s33, 0
      %p65 = por %p63, %p64
      %p66 = scmp.ne.s32.totalorder %s55, %s58
      %p67 = scmp.eq.s32.totalorder %s38, 13
      %p68 = por %p66, %p67
      %p69 = scmp.ne.s32.totalorder %s58, %s59
      %p70 = scmp.eq.s32.totalorder %s38, 0
      %p71 = por %p69, %p70
      %p72 = scmp.ne.s32.totalorder %s58, %s59
      %p73 = scmp.eq.s32.totalorder %s39, 13
      %p74 = por %p72, %p73
      %p76 = scmp.ne.s32.totalorder %s59, %s75
      %p77 = scmp.eq.s32.totalorder %s39, 0
      %p78 = por %p76, %p77
      %s79 = ssub.s32 %s41, %s48
      %s80 = ssub.s32 %s40, %s52
      %s81 = sor.u32 %s79, %s80
      %p82 = scmp.eq.s32.totalorder %s81, 0
      %s84 = sadd.s32 %s83, 1
      %s85 = scalar_select %p82, %s83, %s84
      %p88 = pneg %p82
      %p89 = scmp.eq.s32.totalorder %s33, 13
      %p90 = por %p88, %p89
      %p91 = scmp.ne.s32.totalorder %s83, %s86
      %p92 = scmp.eq.s32.totalorder %s33, 0
      %p93 = por %p91, %p92
      %p94 = scmp.ne.s32.totalorder %s83, %s86
      %p95 = scmp.eq.s32.totalorder %s38, 13
      %p96 = por %p94, %p95
      %p97 = scmp.ne.s32.totalorder %s86, %s87
      %p98 = scmp.eq.s32.totalorder %s38, 0
      %p99 = por %p97, %p98
      %p100 = scmp.ne.s32.totalorder %s86, %s87
      %p101 = scmp.eq.s32.totalorder %s39, 13
      %p102 = por %p100, %p101
      %p104 = scmp.ne.s32.totalorder %s87, %s103
      %p105 = scmp.eq.s32.totalorder %s39, 0
      %p106 = por %p104, %p105
      %s108 = sadd.s32 %s107, 1
      %p111 = scmp.eq.s32.totalorder %s33, 13
      %p112 = scmp.ne.s32.totalorder %s107, %s109
      %p113 = scmp.eq.s32.totalorder %s33, 0
      %p114 = por %p112, %p113
      %p115 = scmp.ne.s32.totalorder %s107, %s109
      %p116 = scmp.eq.s32.totalorder %s38, 13
      %p117 = por %p115, %p116
      %p118 = scmp.ne.s32.totalorder %s109, %s110
      %p119 = scmp.eq.s32.totalorder %s38, 0
      %p120 = por %p118, %p119
      %p121 = scmp.ne.s32.totalorder %s109, %s110
      %p122 = scmp.eq.s32.totalorder %s39, 13
      %p123 = por %p121, %p122
      %p125 = scmp.ne.s32.totalorder %s110, %s124
      %p126 = scmp.eq.s32.totalorder %s39, 0
      %p127 = por %p125, %p126
      %s129 = sadd.s32 %s128, 1
      %p132 = scmp.eq.s32.totalorder %s33, 13
      %p133 = scmp.ne.s32.totalorder %s128, %s130
      %p134 = scmp.eq.s32.totalorder %s33, 0
      %p135 = por %p133, %p134
      %p136 = scmp.ne.s32.totalorder %s128, %s130
      %p137 = scmp.eq.s32.totalorder %s38, 13
      %p138 = por %p136, %p137
      %p139 = scmp.ne.s32.totalorder %s130, %s131
      %p140 = scmp.eq.s32.totalorder %s38, 0
      %p141 = por %p139, %p140
      %p142 = scmp.ne.s32.totalorder %s130, %s131
      %p143 = scmp.eq.s32.totalorder %s39, 13
      %p144 = por %p142, %p143
      %p146 = scmp.ne.s32.totalorder %s131, %s145
      %p147 = scmp.eq.s32.totalorder %s39, 0
      %p148 = por %p146, %p147
      %s150 = sadd.s32 %s149, 1
      %p153 = scmp.eq.s32.totalorder %s33, 13
      %p154 = scmp.ne.s32.totalorder %s149, %s151
      %p155 = scmp.eq.s32.totalorder %s33, 0
      %p156 = por %p154, %p155
      %p157 = scmp.ne.s32.totalorder %s149, %s151
      %p158 = scmp.eq.s32.totalorder %s38, 13
      %p159 = por %p157, %p158
      %p160 = scmp.ne.s32.totalorder %s151, %s152
      %p161 = scmp.eq.s32.totalorder %s38, 0
      %p162 = por %p160, %p161
      %p163 = scmp.ne.s32.totalorder %s151, %s152
      %p164 = scmp.eq.s32.totalorder %s39, 13
      %p165 = por %p163, %p164
      %p167 = scmp.ne.s32.totalorder %s152, %s166
      %p168 = scmp.eq.s32.totalorder %s39, 0
      %p169 = por %p167, %p168
      %s171 = sadd.s32 %s170, 1
      %p174 = scmp.eq.s32.totalorder %s33, 13
      %p175 = scmp.ne.s32.totalorder %s170, %s172
      %p176 = scmp.eq.s32.totalorder %s33, 0
      %p177 = por %p175, %p176
      %p178 = scmp.ne.s32.totalorder %s170, %s172
      %p179 = scmp.eq.s32.totalorder %s38, 13
      %p180 = por %p178, %p179
      %p181 = scmp.ne.s32.totalorder %s172, %s173
      %p182 = scmp.eq.s32.totalorder %s38, 0
      %p183 = por %p181, %p182
      %p184 = scmp.ne.s32.totalorder %s172, %s173
      %p185 = scmp.eq.s32.totalorder %s39, 13
      %p186 = por %p184, %p185
      %p188 = scmp.ne.s32.totalorder %s173, %s187
      %p189 = scmp.eq.s32.totalorder %s39, 0
      %p190 = por %p188, %p189
      %s192 = sadd.s32 %s191, 1
      %p195 = scmp.eq.s32.totalorder %s33, 13
      %p196 = scmp.ne.s32.totalorder %s191, %s193
      %p197 = scmp.eq.s32.totalorder %s33, 0
      %p198 = por %p196, %p197
      %p199 = scmp.ne.s32.totalorder %s191, %s193
      %p200 = scmp.eq.s32.totalorder %s38, 13
      %p201 = por %p199, %p200
      %p202 = scmp.ne.s32.totalorder %s193, %s194
      %p203 = scmp.eq.s32.totalorder %s38, 0
      %p204 = por %p202, %p203
      %p205 = scmp.ne.s32.totalorder %s193, %s194
      %p206 = scmp.eq.s32.totalorder %s39, 13
      %p207 = por %p205, %p206
      %p209 = scmp.ne.s32.totalorder %s194, %s208
      %p210 = scmp.eq.s32.totalorder %s39, 0
      %p211 = por %p209, %p210
      %s213 = sadd.s32 %s212, 1
      %p216 = scmp.eq.s32.totalorder %s33, 13
      %p217 = scmp.ne.s32.totalorder %s212, %s214
      %p218 = scmp.eq.s32.totalorder %s33, 0
      %p219 = por %p217, %p218
      %p220 = scmp.ne.s32.totalorder %s212, %s214
      %p221 = scmp.eq.s32.totalorder %s38, 13
      %p222 = por %p220, %p221
      %p223 = scmp.ne.s32.totalorder %s214, %s215
      %p224 = scmp.eq.s32.totalorder %s38, 0
      %p225 = por %p223, %p224
      %p226 = scmp.ne.s32.totalorder %s214, %s215
      %p227 = scmp.eq.s32.totalorder %s39, 13
      %p228 = por %p226, %p227
      %p230 = scmp.ne.s32.totalorder %s215, %s229
      %p231 = scmp.eq.s32.totalorder %s39, 0
      %p232 = por %p230, %p231
      %s234 = sadd.s32 %s233, 1
      %p237 = scmp.eq.s32.totalorder %s33, 13
      %p238 = scmp.ne.s32.totalorder %s233, %s235
      %p239 = scmp.eq.s32.totalorder %s33, 0
      %p240 = por %p238, %p239
      %p241 = scmp.ne.s32.totalorder %s233, %s235
      %p242 = scmp.eq.s32.totalorder %s38, 13
      %p243 = por %p241, %p242
      %p244 = scmp.ne.s32.totalorder %s235, %s236
      %p245 = scmp.eq.s32.totalorder %s38, 0
      %p246 = por %p244, %p245
      %p247 = scmp.ne.s32.totalorder %s235, %s236
      %p248 = scmp.eq.s32.totalorder %s39, 13
      %p249 = por %p247, %p248
      %p251 = scmp.ne.s32.totalorder %s236, %s250
      %p252 = scmp.eq.s32.totalorder %s39, 0
      %p253 = por %p251, %p252
      %s255 = sadd.s32 %s254, 1
      %p258 = scmp.eq.s32.totalorder %s33, 13
      %p259 = scmp.ne.s32.totalorder %s254, %s256
      %p260 = scmp.eq.s32.totalorder %s33, 0
      %p261 = por %p259, %p260
      %p262 = scmp.ne.s32.totalorder %s254, %s256
      %p263 = scmp.eq.s32.totalorder %s38, 13
      %p264 = por %p262, %p263
      %p265 = scmp.ne.s32.totalorder %s256, %s257
      %p266 = scmp.eq.s32.totalorder %s38, 0
      %p267 = por %p265, %p266
      %p268 = scmp.ne.s32.totalorder %s256, %s257
      %p269 = scmp.eq.s32.totalorder %s39, 13
      %p270 = por %p268, %p269
      %p272 = scmp.ne.s32.totalorder %s257, %s271
      %p273 = scmp.eq.s32.totalorder %s39, 0
      %p274 = por %p272, %p273
      %s276 = sadd.s32 %s275, 1
      %p279 = scmp.eq.s32.totalorder %s33, 13
      %p280 = scmp.ne.s32.totalorder %s275, %s277
      %p281 = scmp.eq.s32.totalorder %s33, 0
      %p282 = por %p280, %p281
      %p283 = scmp.ne.s32.totalorder %s275, %s277
      %p284 = scmp.eq.s32.totalorder %s38, 13
      %p285 = por %p283, %p284
      %p286 = scmp.ne.s32.totalorder %s277, %s278
      %p287 = scmp.eq.s32.totalorder %s38, 0
      %p288 = por %p286, %p287
      %p289 = scmp.ne.s32.totalorder %s277, %s278
      %p290 = scmp.eq.s32.totalorder %s39, 13
      %p291 = por %p289, %p290
      %p293 = scmp.ne.s32.totalorder %s278, %s292
      %p294 = scmp.eq.s32.totalorder %s39, 0
      %p295 = por %p293, %p294
      %s297 = sadd.s32 %s296, 1
      %p300 = scmp.eq.s32.totalorder %s33, 13
      %p301 = scmp.ne.s32.totalorder %s296, %s298
      %p302 = scmp.eq.s32.totalorder %s33, 0
      %p303 = por %p301, %p302
      %p304 = scmp.ne.s32.totalorder %s296, %s298
      %p305 = scmp.eq.s32.totalorder %s38, 13
      %p306 = por %p304, %p305
      %p307 = scmp.ne.s32.totalorder %s298, %s299
      %p308 = scmp.eq.s32.totalorder %s38, 0
      %p309 = por %p307, %p308
      %p310 = scmp.ne.s32.totalorder %s298, %s299
      %p311 = scmp.eq.s32.totalorder %s39, 13
      %p312 = por %p310, %p311
      %p314 = scmp.ne.s32.totalorder %s299, %s313
      %p315 = scmp.eq.s32.totalorder %s39, 0
      %p316 = por %p314, %p315
      %s317 = ssub.s32 %s41, %s48
      %s318 = ssub.s32 %s40, %s52
      %s319 = sor.u32 %s317, %s318
      %p320 = scmp.eq.s32.totalorder %s319, 0
      %s322 = sadd.s32 %s321, 1
      %s323 = scalar_select %p320, %s321, %s322
      %p326 = pneg %p320
      %p327 = scmp.eq.s32.totalorder %s33, 13
      %p328 = por %p326, %p327
      %p329 = scmp.ne.s32.totalorder %s321, %s324
      %p330 = scmp.eq.s32.totalorder %s33, 0
      %p331 = por %p329, %p330
      %p332 = scmp.ne.s32.totalorder %s321, %s324
      %p333 = scmp.eq.s32.totalorder %s38, 13
      %p334 = por %p332, %p333
      %p335 = scmp.ne.s32.totalorder %s324, %s325
      %p336 = scmp.eq.s32.totalorder %s38, 0
      %p337 = por %p335, %p336
      %p338 = scmp.ne.s32.totalorder %s324, %s325
      %p339 = scmp.eq.s32.totalorder %s39, 13
      %p340 = por %p338, %p339
      %p342 = scmp.ne.s32.totalorder %s325, %s341
      %p343 = scmp.eq.s32.totalorder %s39, 0
      %p344 = por %p342, %p343
      %s345 = ssub.s32 %s40, %s52
      %p346 = scmp.eq.s32.totalorder %s345, 0
      %s348 = sadd.s32 %s347, 1
      %s349 = scalar_select %p346, %s347, %s348
      %p352 = pneg %p346
      %p353 = scmp.eq.s32.totalorder %s33, 13
      %p354 = por %p352, %p353
      %p355 = scmp.ne.s32.totalorder %s347, %s350
      %p356 = scmp.eq.s32.totalorder %s33, 0
      %p357 = por %p355, %p356
      %p358 = scmp.ne.s32.totalorder %s347, %s350
      %p359 = scmp.eq.s32.totalorder %s38, 13
      %p360 = por %p358, %p359
      %p361 = scmp.ne.s32.totalorder %s350, %s351
      %p362 = scmp.eq.s32.totalorder %s38, 0
      %p363 = por %p361, %p362
      %p364 = scmp.ne.s32.totalorder %s350, %s351
      %p365 = scmp.eq.s32.totalorder %s39, 13
      %p366 = por %p364, %p365
      %p368 = scmp.ne.s32.totalorder %s351, %s367
      %p369 = scmp.eq.s32.totalorder %s39, 0
      %p370 = por %p368, %p369
      %p371 = scmp.le.s32.totalorder 1, %s33
      %p372 = scmp.lt.s32.totalorder %s33, 15
      %p373 = pnand %p371, %p372
      %p374 = pneg %p373
      // Predicated region
      $region9: #{tpu_custom_call.1} parent=5 // pred_check
        _
      $region10: #{tpu_custom_call.1} parent=5 // pred_check_branch
        %376 = sbr.rel (%p373) target = $region12
      $region11: #{tpu_custom_call.1} parent=5 // pred_region
        %s377 = ssub.s32 %s33, 1
        // Predicated region
        $region13: #{tpu_custom_call.1} parent=11 // pred_check
          %p378 = pneg %p71
        $region14: #{tpu_custom_call.1} parent=11 // pred_check_branch
          %380 = sbr.rel (%p378) target = $region16
        $region15: #{tpu_custom_call.1} parent=11 // pred_region
          %s382 = ssub.s32 128, 128
          %383 = vsyncadd [#allocation4], %s382
          %s384 = smul.addr %s42, 128
          %s385 = scalar_lea.hbm %s0, %s384
          %s387 = sshll.u32 [#allocation3], 4
          %s388 = int_to_ptr.vmem [resolvable:$true] %s387
          %390 = dma.hbm_to_vmem [thread:$0]  %s385, 128, %s388, [#allocation4]
        $region16: #{tpu_custom_call.1} parent=11 // pred_fallthru
          _
        // Predicated region
        $region17: #{tpu_custom_call.1} parent=11 // pred_check
          %p391 = pneg %p120
        $region18: #{tpu_custom_call.1} parent=11 // pred_check_branch
          %393 = sbr.rel (%p391) target = $region20
        $region19: #{tpu_custom_call.1} parent=11 // pred_region
          %s395 = ssub.s32 512, 512
          %396 = vsyncadd [#allocation7], %s395
          %s397 = sshll.u32 [#allocation8], 4
          %s398 = int_to_ptr.vmem [resolvable:$true] %s397
          %403 = dma.hbm_to_vmem [thread:$0]  %s2, 512, %s398, [#allocation7], 128, 128, 8
        $region20: #{tpu_custom_call.1} parent=11 // pred_fallthru
          _
        // Predicated region
        $region21: #{tpu_custom_call.1} parent=11 // pred_check
          %p404 = pneg %p141
        $region22: #{tpu_custom_call.1} parent=11 // pred_check_branch
          %406 = sbr.rel (%p404) target = $region24
        $region23: #{tpu_custom_call.1} parent=11 // pred_region
          %s408 = ssub.s32 512, 512
          %409 = vsyncadd [#allocation10], %s408
          %s410 = sshll.u32 [#allocation9], 4
          %s411 = int_to_ptr.vmem [resolvable:$true] %s410
          %416 = dma.hbm_to_vmem [thread:$0]  %s3, 512, %s411, [#allocation10], 128, 128, 8
        $region24: #{tpu_custom_call.1} parent=11 // pred_fallthru
          _
        // Predicated region
        $region25: #{tpu_custom_call.1} parent=11 // pred_check
          %p417 = pneg %p162
        $region26: #{tpu_custom_call.1} parent=11 // pred_check_branch
          %419 = sbr.rel (%p417) target = $region28
        $region27: #{tpu_custom_call.1} parent=11 // pred_region
          %s421 = ssub.s32 512, 512
          %422 = vsyncadd [#allocation10], %s421
          %s423 = sshll.u32 [#allocation11], 4
          %s424 = int_to_ptr.vmem [resolvable:$true] %s423
          %429 = dma.hbm_to_vmem [thread:$0]  %s4, 512, %s424, [#allocation10], 128, 128, 8
        $region28: #{tpu_custom_call.1} parent=11 // pred_fallthru
          _
        // Predicated region
        $region29: #{tpu_custom_call.1} parent=11 // pred_check
          %p430 = pneg %p183
        $region30: #{tpu_custom_call.1} parent=11 // pred_check_branch
          %432 = sbr.rel (%p430) target = $region32
        $region31: #{tpu_custom_call.1} parent=11 // pred_region
          %s434 = ssub.s32 512, 512
          %435 = vsyncadd [#allocation13], %s434
          %s436 = sshll.u32 [#allocation12], 4
          %s437 = int_to_ptr.vmem [resolvable:$true] %s436
          %442 = dma.hbm_to_vmem [thread:$0]  %s5, 512, %s437, [#allocation13], 128, 128, 8
        $region32: #{tpu_custom_call.1} parent=11 // pred_fallthru
          _
        // Predicated region
        $region33: #{tpu_custom_call.1} parent=11 // pred_check
          %p443 = pneg %p204
        $region34: #{tpu_custom_call.1} parent=11 // pred_check_branch
          %445 = sbr.rel (%p443) target = $region36
        $region35: #{tpu_custom_call.1} parent=11 // pred_region
          %s447 = ssub.s32 512, 512
          %448 = vsyncadd [#allocation13], %s447
          %s449 = sshll.u32 [#allocation14], 4
          %s450 = int_to_ptr.vmem [resolvable:$true] %s449
          %455 = dma.hbm_to_vmem [thread:$0]  %s6, 512, %s450, [#allocation13], 128, 128, 8
        $region36: #{tpu_custom_call.1} parent=11 // pred_fallthru
          _
        // Predicated region
        $region37: #{tpu_custom_call.1} parent=11 // pred_check
          %p456 = pneg %p225
        $region38: #{tpu_custom_call.1} parent=11 // pred_check_branch
          %458 = sbr.rel (%p456) target = $region40
        $region39: #{tpu_custom_call.1} parent=11 // pred_region
          %s460 = ssub.s32 512, 512
          %461 = vsyncadd [#allocation16], %s460
          %s462 = sshll.u32 [#allocation15], 4
          %s463 = int_to_ptr.vmem [resolvable:$true] %s462
          %468 = dma.hbm_to_vmem [thread:$0]  %s7, 512, %s463, [#allocation16], 128, 128, 8
        $region40: #{tpu_custom_call.1} parent=11 // pred_fallthru
          _
        // Predicated region
        $region41: #{tpu_custom_call.1} parent=11 // pred_check
          %p469 = pneg %p246
        $region42: #{tpu_custom_call.1} parent=11 // pred_check_branch
          %471 = sbr.rel (%p469) target = $region44
        $region43: #{tpu_custom_call.1} parent=11 // pred_region
          %s473 = ssub.s32 16, 16
          %474 = vsyncadd [#allocation16], %s473
          %s476 = sshll.u32 [#allocation17], 4
          %s477 = int_to_ptr.vmem [resolvable:$true] %s476
          %479 = dma.hbm_to_vmem [thread:$0]  %s8, 16, %s477, [#allocation16]
        $region44: #{tpu_custom_call.1} parent=11 // pred_fallthru
          _
        // Predicated region
        $region45: #{tpu_custom_call.1} parent=11 // pred_check
          %p480 = pneg %p267
        $region46: #{tpu_custom_call.1} parent=11 // pred_check_branch
          %482 = sbr.rel (%p480) target = $region48
        $region47: #{tpu_custom_call.1} parent=11 // pred_region
          %s484 = ssub.s32 16, 16
          %485 = vsyncadd [#allocation19], %s484
          %s487 = sshll.u32 [#allocation18], 4
          %s488 = int_to_ptr.vmem [resolvable:$true] %s487
          %490 = dma.hbm_to_vmem [thread:$0]  %s9, 16, %s488, [#allocation19]
        $region48: #{tpu_custom_call.1} parent=11 // pred_fallthru
          _
        // Predicated region
        $region49: #{tpu_custom_call.1} parent=11 // pred_check
          %p491 = pneg %p288
        $region50: #{tpu_custom_call.1} parent=11 // pred_check_branch
          %493 = sbr.rel (%p491) target = $region52
        $region51: #{tpu_custom_call.1} parent=11 // pred_region
          %s495 = ssub.s32 16, 16
          %496 = vsyncadd [#allocation19], %s495
          %s498 = sshll.u32 [#allocation20], 4
          %s499 = int_to_ptr.vmem [resolvable:$true] %s498
          %501 = dma.hbm_to_vmem [thread:$0]  %s10, 16, %s499, [#allocation19]
        $region52: #{tpu_custom_call.1} parent=11 // pred_fallthru
          _
        // Predicated region
        $region53: #{tpu_custom_call.1} parent=11 // pred_check
          %p502 = pneg %p309
        $region54: #{tpu_custom_call.1} parent=11 // pred_check_branch
          %504 = sbr.rel (%p502) target = $region56
        $region55: #{tpu_custom_call.1} parent=11 // pred_region
          %s506 = ssub.s32 16, 16
          %507 = vsyncadd [#allocation22], %s506
          %s509 = sshll.u32 [#allocation21], 4
          %s510 = int_to_ptr.vmem [resolvable:$true] %s509
          %512 = dma.hbm_to_vmem [thread:$0]  %s11, 16, %s510, [#allocation22]
        $region56: #{tpu_custom_call.1} parent=11 // pred_fallthru
          _
      $region12: #{tpu_custom_call.1} parent=5 // pred_fallthru
        _
      %p513 = scmp.lt.s32.totalorder %s33, 14
      // Predicated region
      $region57: #{tpu_custom_call.1} parent=5 // pred_check
        %p514 = pneg %p513
      $region58: #{tpu_custom_call.1} parent=5 // pred_check_branch
        %516 = sbr.rel (%p514) target = $region60
      $region59: #{tpu_custom_call.1} parent=5 // pred_region
        // Predicated region
        $region61: #{tpu_custom_call.1} parent=59 // pred_check
          %p517 = pneg %p93
        $region62: #{tpu_custom_call.1} parent=59 // pred_check_branch
          %519 = sbr.rel (%p517) target = $region64
        $region63: #{tpu_custom_call.1} parent=59 // pred_region
          %s520 = sand.u32 %s33, 1
          %s521 = scalar_lea.sflag [#allocation7], %s520
          %s522 = sand.u32 %s83, 1
          %s523 = smul.addr %s522, 8
          %s524 = scalar_lea.vmem [#allocation6], %s523
          %s526 = ssub.s32 128, 128
          %527 = vsyncadd %s521, %s526
          %s528 = sadd.s32 %s40, %s41
          %s529 = smul.addr %s528, 128
          %s530 = scalar_lea.hbm %s1, %s529
          %s532 = sshll.u32 %s524, 4
          %s533 = int_to_ptr.vmem [resolvable:$true] %s532
          %535 = dma.hbm_to_vmem [thread:$0]  %s530, 128, %s533, %s521
        $region64: #{tpu_custom_call.1} parent=59 // pred_fallthru
          _
      $region60: #{tpu_custom_call.1} parent=5 // pred_fallthru
        _
      %p536 = scmp.le.s32.totalorder 1, %s33
      %p537 = scmp.lt.s32.totalorder %s33, 15
      %p538 = pnand %p536, %p537
      %p539 = pneg %p538
      // Predicated region
      $region65: #{tpu_custom_call.1} parent=5 // pred_check
        _
      $region66: #{tpu_custom_call.1} parent=5 // pred_check_branch
        %541 = sbr.rel (%p538) target = $region68
      $region67: #{tpu_custom_call.1} parent=5 // pred_region
        %s542 = ssub.s32 %s33, 1
        // Predicated region
        $region69: #{tpu_custom_call.1} parent=67 // pred_check
          %p543 = pneg %p71
        $region70: #{tpu_custom_call.1} parent=67 // pred_check_branch
          %545 = sbr.rel (%p543) target = $region72
        $region71: #{tpu_custom_call.1} parent=67 // pred_region
          %546 = dma.done [#allocation4], 128
        $region72: #{tpu_custom_call.1} parent=67 // pred_fallthru
          _
        %s547 = sand.u32 %s38, 1
        %s548 = scalar_lea.sflag [#allocation7], %s547
        %s549 = sand.u32 %s86, 1
        %s550 = smul.addr %s549, 8
        %s551 = scalar_lea.vmem [#allocation6], %s550
        // Predicated region
        $region73: #{tpu_custom_call.1} parent=67 // pred_check
          %p552 = pneg %p99
        $region74: #{tpu_custom_call.1} parent=67 // pred_check_branch
          %554 = sbr.rel (%p552) target = $region76
        $region75: #{tpu_custom_call.1} parent=67 // pred_region
          %555 = dma.done %s548, 128
        $region76: #{tpu_custom_call.1} parent=67 // pred_fallthru
          _
        // Predicated region
        $region77: #{tpu_custom_call.1} parent=67 // pred_check
          %p556 = pneg %p120
        $region78: #{tpu_custom_call.1} parent=67 // pred_check_branch
          %558 = sbr.rel (%p556) target = $region80
        $region79: #{tpu_custom_call.1} parent=67 // pred_region
          %559 = dma.done [#allocation7], 512
        $region80: #{tpu_custom_call.1} parent=67 // pred_fallthru
          _
        // Predicated region
        $region81: #{tpu_custom_call.1} parent=67 // pred_check
          %p560 = pneg %p141
        $region82: #{tpu_custom_call.1} parent=67 // pred_check_branch
          %562 = sbr.rel (%p560) target = $region84
        $region83: #{tpu_custom_call.1} parent=67 // pred_region
          %563 = dma.done [#allocation10], 512
        $region84: #{tpu_custom_call.1} parent=67 // pred_fallthru
          _
        // Predicated region
        $region85: #{tpu_custom_call.1} parent=67 // pred_check
          %p564 = pneg %p162
        $region86: #{tpu_custom_call.1} parent=67 // pred_check_branch
          %566 = sbr.rel (%p564) target = $region88
        $region87: #{tpu_custom_call.1} parent=67 // pred_region
          %567 = dma.done [#allocation10], 512
        $region88: #{tpu_custom_call.1} parent=67 // pred_fallthru
          _
        // Predicated region
        $region89: #{tpu_custom_call.1} parent=67 // pred_check
          %p568 = pneg %p183
        $region90: #{tpu_custom_call.1} parent=67 // pred_check_branch
          %570 = sbr.rel (%p568) target = $region92
        $region91: #{tpu_custom_call.1} parent=67 // pred_region
          %571 = dma.done [#allocation13], 512
        $region92: #{tpu_custom_call.1} parent=67 // pred_fallthru
          _
        // Predicated region
        $region93: #{tpu_custom_call.1} parent=67 // pred_check
          %p572 = pneg %p204
        $region94: #{tpu_custom_call.1} parent=67 // pred_check_branch
          %574 = sbr.rel (%p572) target = $region96
        $region95: #{tpu_custom_call.1} parent=67 // pred_region
          %575 = dma.done [#allocation13], 512
        $region96: #{tpu_custom_call.1} parent=67 // pred_fallthru
          _
        // Predicated region
        $region97: #{tpu_custom_call.1} parent=67 // pred_check
          %p576 = pneg %p225
        $region98: #{tpu_custom_call.1} parent=67 // pred_check_branch
          %578 = sbr.rel (%p576) target = $region100
        $region99: #{tpu_custom_call.1} parent=67 // pred_region
          %579 = dma.done [#allocation16], 512
        $region100: #{tpu_custom_call.1} parent=67 // pred_fallthru
          _
        // Predicated region
        $region101: #{tpu_custom_call.1} parent=67 // pred_check
          %p580 = pneg %p246
        $region102: #{tpu_custom_call.1} parent=67 // pred_check_branch
          %582 = sbr.rel (%p580) target = $region104
        $region103: #{tpu_custom_call.1} parent=67 // pred_region
          %583 = dma.done [#allocation16], 16
        $region104: #{tpu_custom_call.1} parent=67 // pred_fallthru
          _
        // Predicated region
        $region105: #{tpu_custom_call.1} parent=67 // pred_check
          %p584 = pneg %p267
        $region106: #{tpu_custom_call.1} parent=67 // pred_check_branch
          %586 = sbr.rel (%p584) target = $region108
        $region107: #{tpu_custom_call.1} parent=67 // pred_region
          %587 = dma.done [#allocation19], 16
        $region108: #{tpu_custom_call.1} parent=67 // pred_fallthru
          _
        // Predicated region
        $region109: #{tpu_custom_call.1} parent=67 // pred_check
          %p588 = pneg %p288
        $region110: #{tpu_custom_call.1} parent=67 // pred_check_branch
          %590 = sbr.rel (%p588) target = $region112
        $region111: #{tpu_custom_call.1} parent=67 // pred_region
          %591 = dma.done [#allocation19], 16
        $region112: #{tpu_custom_call.1} parent=67 // pred_fallthru
          _
        // Predicated region
        $region113: #{tpu_custom_call.1} parent=67 // pred_check
          %p592 = pneg %p309
        $region114: #{tpu_custom_call.1} parent=67 // pred_check_branch
          %594 = sbr.rel (%p592) target = $region116
        $region115: #{tpu_custom_call.1} parent=67 // pred_region
          %595 = dma.done [#allocation22], 16
        $region116: #{tpu_custom_call.1} parent=67 // pred_fallthru
          _
        %p596 = pneg %p71
        %p597 = pneg %p68
        %s598 = sand.u32 %s38, 1
        %s599 = scalar_lea.sflag [#allocation7], %s598
        %s600 = sand.u32 %s86, 1
        %s601 = smul.addr %s600, 8
        %s602 = scalar_lea.vmem [#allocation6], %s601
        %p603 = pneg %p99
        %p604 = pneg %p96
        %p605 = pneg %p120
        %p606 = pneg %p117
        %p607 = pneg %p141
        %p608 = pneg %p138
        %p609 = pneg %p162
        %p610 = pneg %p159
        %p611 = pneg %p183
        %p612 = pneg %p180
        %p613 = pneg %p204
        %p614 = pneg %p201
        %p615 = pneg %p225
        %p616 = pneg %p222
        %p617 = pneg %p246
        %p618 = pneg %p243
        %p619 = pneg %p267
        %p620 = pneg %p264
        %p621 = pneg %p288
        %p622 = pneg %p285
        %p623 = pneg %p309
        %p624 = pneg %p306
        %p625 = pneg %p337
        %p626 = pneg %p334
        %s627 = sand.u32 %s324, 1
        %s628 = scalar_lea.sflag [#allocation5], %s627
        %s629 = sand.u32 %s324, 1
        %s630 = smul.addr %s629, 8
        %s631 = scalar_lea.vmem [#allocation23], %s630
        %p632 = pneg %p363
        %p633 = pneg %p360
        %p634 = scmp.eq.s32.totalorder %s43, 0
        // Predicated region
        $region117: #{tpu_custom_call.1} parent=67 // pred_check
          %p635 = pneg %p634
        $region118: #{tpu_custom_call.1} parent=67 // pred_check_branch
          %637 = sbr.rel (%p635) target = $region120
        $region119: #{tpu_custom_call.1} parent=67 // pred_region
          %vm638 = vcmask 261120
          %639 = vst.msk [vmem:[#allocation2] sm:$0xff] %vm638, 0.0
        $region120: #{tpu_custom_call.1} parent=67 // pred_fallthru
          _
        %v640 = vld [vmem:[%s551] sm:$0xff]
        %v641 = vld [vmem:[#allocation2] sm:$0xff]
        %v642 = vld [vmem:[#allocation8] sm:$0xff]
        %v643 = vld [vmem:[#allocation8 + $0x8] sm:$0xff]
        %v644 = vld [vmem:[#allocation8 + $0x10] sm:$0xff]
        %v645 = vld [vmem:[#allocation8 + $0x18] sm:$0xff]
        %v646 = vld [vmem:[#allocation12] sm:$0xff]
        %v647 = vld [vmem:[#allocation12 + $0x8] sm:$0xff]
        %v648 = vld [vmem:[#allocation12 + $0x10] sm:$0xff]
        %v649 = vld [vmem:[#allocation12 + $0x18] sm:$0xff]
        %vm650 = vcmask 261120
        %v652 = vsel %vm650, %v641, 0
        %654 = vmatprep.subr.mxu0 0.0
        %655 = vmatpush1.msra.mxu0 %v646
        %656 = vmatprep.subr.mxu0 0.0
        %657 = vmatpush1.msra.mxu0 %v647
        %658 = vmatprep.subr.mxu0 0.0
        %659 = vmatpush1.msra.mxu0 %v648
        %660 = vmatprep.subr.mxu0 0.0
        %661 = vmatpush1.msra.mxu0 %v649
        %662 = vmatprep.subr.mxu0 0.0
        %663 = vmatpush1.msra.mxu0 0.0
        %664 = vmatprep.subr.mxu0 0.0
        %665 = vmatpush1.msra.mxu0 0.0
        %666 = vmatprep.subr.mxu0 0.0
        %667 = vmatpush1.msra.mxu0 0.0
        %668 = vmatprep.subr.mxu0 0.0
        %669 = vmatpush1.msra.mxu0 0.0
        %670 = vmatprep.subr.mxu0 0.0
        %671 = vmatpush1.msra.mxu0 0.0
        %672 = vmatprep.subr.mxu0 0.0
        %673 = vmatpush1.msra.mxu0 0.0
        %674 = vmatprep.subr.mxu0 0.0
        %675 = vmatpush1.msra.mxu0 0.0
        %676 = vmatprep.subr.mxu0 0.0
        %677 = vmatpush1.msra.mxu0 0.0
        %678 = vmatprep.subr.mxu0 0.0
        %679 = vmatpush1.msra.mxu0 0.0
        %680 = vmatprep.subr.mxu0 0.0
        %681 = vmatpush1.msra.mxu0 0.0
        %682 = vmatprep.subr.mxu0 0.0
        %683 = vmatpush1.msra.mxu0 0.0
        %684 = vmatprep.subr.mxu0 0.0
        %685 = vmatpush1.msra.mxu0 0.0
        %686 = vmatprep.subr.mxu0 0.0
        %687 = vmatpush1.msra.mxu0 0.0
        %688 = vmatprep.subr.mxu0 0.0
        %689 = vmatpush1.msra.mxu0 0.0
        %690 = vmatprep.subr.mxu0 0.0
        %691 = vmatpush1.msra.mxu0 0.0
        %692 = vmatprep.subr.mxu0 0.0
        %693 = vmatpush1.msra.mxu0 0.0
        %694 = vmatprep.subr.mxu0 0.0
        %695 = vmatpush1.msra.mxu0 0.0
        %696 = vmatprep.subr.mxu0 0.0
        %697 = vmatpush1.msra.mxu0 0.0
        %698 = vmatprep.subr.mxu0 0.0
        %699 = vmatpush1.msra.mxu0 0.0
        %700 = vmatprep.subr.mxu0 0.0
        %701 = vmatpush1.msra.mxu0 0.0
        %702 = vmatprep.subr.mxu0 0.0
        %703 = vmatpush1.msra.mxu0 0.0
        %704 = vmatprep.subr.mxu0 0.0
        %705 = vmatpush1.msra.mxu0 0.0
        %706 = vmatprep.subr.mxu0 0.0
        %707 = vmatpush1.msra.mxu0 0.0
        %708 = vmatprep.subr.mxu0 0.0
        %709 = vmatpush1.msra.mxu0 0.0
        %710 = vmatprep.subr.mxu0 0.0
        %711 = vmatpush1.msra.mxu0 0.0
        %712 = vmatprep.subr.mxu0 0.0
        %713 = vmatpush1.msra.mxu0 0.0
        %714 = vmatprep.subr.mxu0 0.0
        %715 = vmatpush1.msra.mxu0 0.0
        %716 = vmatprep.subr.mxu0 0.0
        %717 = vmatpush1.msra.mxu0 0.0
        %718 = vmatprep.mubr.f32.mxu0 0.0
        %719 = vmatmul.mubr.f32.gmra.mrb[0].mxu0 %v652
        %v720 = vpop.f32.mrb[0].mxu0
        %v721 = vadd.f32 0.0, %v720
        %v722 = vpop.f32.mrb[0].mxu0
        %723 = vdwg.mxu0
        %v725 = vsel %vm650, %v640, 0
        %727 = vmatprep.subr.mxu0 0.0
        %728 = vmatpush1.msra.mxu0 %v642
        %729 = vmatprep.subr.mxu0 0.0
        %730 = vmatpush1.msra.mxu0 %v643
        %731 = vmatprep.subr.mxu0 0.0
        %732 = vmatpush1.msra.mxu0 %v644
        %733 = vmatprep.subr.mxu0 0.0
        %734 = vmatpush1.msra.mxu0 %v645
        %735 = vmatprep.subr.mxu0 0.0
        %736 = vmatpush1.msra.mxu0 0.0
        %737 = vmatprep.subr.mxu0 0.0
        %738 = vmatpush1.msra.mxu0 0.0
        %739 = vmatprep.subr.mxu0 0.0
        %740 = vmatpush1.msra.mxu0 0.0
        %741 = vmatprep.subr.mxu0 0.0
        %742 = vmatpush1.msra.mxu0 0.0
        %743 = vmatprep.subr.mxu0 0.0
        %744 = vmatpush1.msra.mxu0 0.0
        %745 = vmatprep.subr.mxu0 0.0
        %746 = vmatpush1.msra.mxu0 0.0
        %747 = vmatprep.subr.mxu0 0.0
        %748 = vmatpush1.msra.mxu0 0.0
        %749 = vmatprep.subr.mxu0 0.0
        %750 = vmatpush1.msra.mxu0 0.0
        %751 = vmatprep.subr.mxu0 0.0
        %752 = vmatpush1.msra.mxu0 0.0
        %753 = vmatprep.subr.mxu0 0.0
        %754 = vmatpush1.msra.mxu0 0.0
        %755 = vmatprep.subr.mxu0 0.0
        %756 = vmatpush1.msra.mxu0 0.0
        %757 = vmatprep.subr.mxu0 0.0
        %758 = vmatpush1.msra.mxu0 0.0
        %759 = vmatprep.subr.mxu0 0.0
        %760 = vmatpush1.msra.mxu0 0.0
        %761 = vmatprep.subr.mxu0 0.0
        %762 = vmatpush1.msra.mxu0 0.0
        %763 = vmatprep.subr.mxu0 0.0
        %764 = vmatpush1.msra.mxu0 0.0
        %765 = vmatprep.subr.mxu0 0.0
        %766 = vmatpush1.msra.mxu0 0.0
        %767 = vmatprep.subr.mxu0 0.0
        %768 = vmatpush1.msra.mxu0 0.0
        %769 = vmatprep.subr.mxu0 0.0
        %770 = vmatpush1.msra.mxu0 0.0
        %771 = vmatprep.subr.mxu0 0.0
        %772 = vmatpush1.msra.mxu0 0.0
        %773 = vmatprep.subr.mxu0 0.0
        %774 = vmatpush1.msra.mxu0 0.0
        %775 = vmatprep.subr.mxu0 0.0
        %776 = vmatpush1.msra.mxu0 0.0
        %777 = vmatprep.subr.mxu0 0.0
        %778 = vmatpush1.msra.mxu0 0.0
        %779 = vmatprep.subr.mxu0 0.0
        %780 = vmatpush1.msra.mxu0 0.0
        %781 = vmatprep.subr.mxu0 0.0
        %782 = vmatpush1.msra.mxu0 0.0
        %783 = vmatprep.subr.mxu0 0.0
        %784 = vmatpush1.msra.mxu0 0.0
        %785 = vmatprep.subr.mxu0 0.0
        %786 = vmatpush1.msra.mxu0 0.0
        %787 = vmatprep.subr.mxu0 0.0
        %788 = vmatpush1.msra.mxu0 0.0
        %789 = vmatprep.subr.mxu0 0.0
        %790 = vmatpush1.msra.mxu0 0.0
        %791 = vmatprep.mubr.f32.mxu0 0.0
        %792 = vmatmul.mubr.f32.gmra.mrb[0].mxu0 %v725
        %v793 = vpop.f32.mrb[0].mxu0
        %v794 = vadd.f32 %v721, %v793
        %v795 = vpop.f32.mrb[0].mxu0
        %796 = vdwg.mxu0
        %v797 = vld [vmem:[#allocation17] sm:$0x1]
        %v799 = vlaneseq
        %v800 = vshrl.u32 %v799, 7
        %v801 = vsub.s32 0, %v800
        %v802 = vrot.slane %v797, %v801
        %v804 = vadd.f32 %v794, %v802
        %v805 = vxor.u32 %v804, 2147483648
        %v806 = vmul.f32 %v805, 1.442695
        %v807 = vpow.pop %v806
        %v808 = vadd.f32 %v807, 1.0
        %v809 = vrcp.pop %v808
        %v810 = vmul.f32 1.0, %v809
        %v811 = vld [vmem:[#allocation9] sm:$0xff]
        %v812 = vld [vmem:[#allocation9 + $0x8] sm:$0xff]
        %v813 = vld [vmem:[#allocation9 + $0x10] sm:$0xff]
        %v814 = vld [vmem:[#allocation9 + $0x18] sm:$0xff]
        %v815 = vld [vmem:[#allocation14] sm:$0xff]
        %v816 = vld [vmem:[#allocation14 + $0x8] sm:$0xff]
        %v817 = vld [vmem:[#allocation14 + $0x10] sm:$0xff]
        %v818 = vld [vmem:[#allocation14 + $0x18] sm:$0xff]
        %819 = vmatprep.subr.mxu0 0.0
        %820 = vmatpush1.msra.mxu0 %v815
        %821 = vmatprep.subr.mxu0 0.0
        %822 = vmatpush1.msra.mxu0 %v816
        %823 = vmatprep.subr.mxu0 0.0
        %824 = vmatpush1.msra.mxu0 %v817
        %825 = vmatprep.subr.mxu0 0.0
        %826 = vmatpush1.msra.mxu0 %v818
        %827 = vmatprep.subr.mxu0 0.0
        %828 = vmatpush1.msra.mxu0 0.0
        %829 = vmatprep.subr.mxu0 0.0
        %830 = vmatpush1.msra.mxu0 0.0
        %831 = vmatprep.subr.mxu0 0.0
        %832 = vmatpush1.msra.mxu0 0.0
        %833 = vmatprep.subr.mxu0 0.0
        %834 = vmatpush1.msra.mxu0 0.0
        %835 = vmatprep.subr.mxu0 0.0
        %836 = vmatpush1.msra.mxu0 0.0
        %837 = vmatprep.subr.mxu0 0.0
        %838 = vmatpush1.msra.mxu0 0.0
        %839 = vmatprep.subr.mxu0 0.0
        %840 = vmatpush1.msra.mxu0 0.0
        %841 = vmatprep.subr.mxu0 0.0
        %842 = vmatpush1.msra.mxu0 0.0
        %843 = vmatprep.subr.mxu0 0.0
        %844 = vmatpush1.msra.mxu0 0.0
        %845 = vmatprep.subr.mxu0 0.0
        %846 = vmatpush1.msra.mxu0 0.0
        %847 = vmatprep.subr.mxu0 0.0
        %848 = vmatpush1.msra.mxu0 0.0
        %849 = vmatprep.subr.mxu0 0.0
        %850 = vmatpush1.msra.mxu0 0.0
        %851 = vmatprep.subr.mxu0 0.0
        %852 = vmatpush1.msra.mxu0 0.0
        %853 = vmatprep.subr.mxu0 0.0
        %854 = vmatpush1.msra.mxu0 0.0
        %855 = vmatprep.subr.mxu0 0.0
        %856 = vmatpush1.msra.mxu0 0.0
        %857 = vmatprep.subr.mxu0 0.0
        %858 = vmatpush1.msra.mxu0 0.0
        %859 = vmatprep.subr.mxu0 0.0
        %860 = vmatpush1.msra.mxu0 0.0
        %861 = vmatprep.subr.mxu0 0.0
        %862 = vmatpush1.msra.mxu0 0.0
        %863 = vmatprep.subr.mxu0 0.0
        %864 = vmatpush1.msra.mxu0 0.0
        %865 = vmatprep.subr.mxu0 0.0
        %866 = vmatpush1.msra.mxu0 0.0
        %867 = vmatprep.subr.mxu0 0.0
        %868 = vmatpush1.msra.mxu0 0.0
        %869 = vmatprep.subr.mxu0 0.0
        %870 = vmatpush1.msra.mxu0 0.0
        %871 = vmatprep.subr.mxu0 0.0
        %872 = vmatpush1.msra.mxu0 0.0
        %873 = vmatprep.subr.mxu0 0.0
        %874 = vmatpush1.msra.mxu0 0.0
        %875 = vmatprep.subr.mxu0 0.0
        %876 = vmatpush1.msra.mxu0 0.0
        %877 = vmatprep.subr.mxu0 0.0
        %878 = vmatpush1.msra.mxu0 0.0
        %879 = vmatprep.subr.mxu0 0.0
        %880 = vmatpush1.msra.mxu0 0.0
        %881 = vmatprep.subr.mxu0 0.0
        %882 = vmatpush1.msra.mxu0 0.0
        %883 = vmatprep.mubr.f32.mxu0 0.0
        %884 = vmatmul.mubr.f32.gmra.mrb[0].mxu0 %v652
        %v885 = vpop.f32.mrb[0].mxu0
        %v886 = vadd.f32 0.0, %v885
        %v887 = vpop.f32.mrb[0].mxu0
        %888 = vdwg.mxu0
        %889 = vmatprep.subr.mxu0 0.0
        %890 = vmatpush1.msra.mxu0 %v811
        %891 = vmatprep.subr.mxu0 0.0
        %892 = vmatpush1.msra.mxu0 %v812
        %893 = vmatprep.subr.mxu0 0.0
        %894 = vmatpush1.msra.mxu0 %v813
        %895 = vmatprep.subr.mxu0 0.0
        %896 = vmatpush1.msra.mxu0 %v814
        %897 = vmatprep.subr.mxu0 0.0
        %898 = vmatpush1.msra.mxu0 0.0
        %899 = vmatprep.subr.mxu0 0.0
        %900 = vmatpush1.msra.mxu0 0.0
        %901 = vmatprep.subr.mxu0 0.0
        %902 = vmatpush1.msra.mxu0 0.0
        %903 = vmatprep.subr.mxu0 0.0
        %904 = vmatpush1.msra.mxu0 0.0
        %905 = vmatprep.subr.mxu0 0.0
        %906 = vmatpush1.msra.mxu0 0.0
        %907 = vmatprep.subr.mxu0 0.0
        %908 = vmatpush1.msra.mxu0 0.0
        %909 = vmatprep.subr.mxu0 0.0
        %910 = vmatpush1.msra.mxu0 0.0
        %911 = vmatprep.subr.mxu0 0.0
        %912 = vmatpush1.msra.mxu0 0.0
        %913 = vmatprep.subr.mxu0 0.0
        %914 = vmatpush1.msra.mxu0 0.0
        %915 = vmatprep.subr.mxu0 0.0
        %916 = vmatpush1.msra.mxu0 0.0
        %917 = vmatprep.subr.mxu0 0.0
        %918 = vmatpush1.msra.mxu0 0.0
        %919 = vmatprep.subr.mxu0 0.0
        %920 = vmatpush1.msra.mxu0 0.0
        %921 = vmatprep.subr.mxu0 0.0
        %922 = vmatpush1.msra.mxu0 0.0
        %923 = vmatprep.subr.mxu0 0.0
        %924 = vmatpush1.msra.mxu0 0.0
        %925 = vmatprep.subr.mxu0 0.0
        %926 = vmatpush1.msra.mxu0 0.0
        %927 = vmatprep.subr.mxu0 0.0
        %928 = vmatpush1.msra.mxu0 0.0
        %929 = vmatprep.subr.mxu0 0.0
        %930 = vmatpush1.msra.mxu0 0.0
        %931 = vmatprep.subr.mxu0 0.0
        %932 = vmatpush1.msra.mxu0 0.0
        %933 = vmatprep.subr.mxu0 0.0
        %934 = vmatpush1.msra.mxu0 0.0
        %935 = vmatprep.subr.mxu0 0.0
        %936 = vmatpush1.msra.mxu0 0.0
        %937 = vmatprep.subr.mxu0 0.0
        %938 = vmatpush1.msra.mxu0 0.0
        %939 = vmatprep.subr.mxu0 0.0
        %940 = vmatpush1.msra.mxu0 0.0
        %941 = vmatprep.subr.mxu0 0.0
        %942 = vmatpush1.msra.mxu0 0.0
        %943 = vmatprep.subr.mxu0 0.0
        %944 = vmatpush1.msra.mxu0 0.0
        %945 = vmatprep.subr.mxu0 0.0
        %946 = vmatpush1.msra.mxu0 0.0
        %947 = vmatprep.subr.mxu0 0.0
        %948 = vmatpush1.msra.mxu0 0.0
        %949 = vmatprep.subr.mxu0 0.0
        %950 = vmatpush1.msra.mxu0 0.0
        %951 = vmatprep.subr.mxu0 0.0
        %952 = vmatpush1.msra.mxu0 0.0
        %953 = vmatprep.mubr.f32.mxu0 0.0
        %954 = vmatmul.mubr.f32.gmra.mrb[0].mxu0 %v725
        %v955 = vpop.f32.mrb[0].mxu0
        %v956 = vadd.f32 %v886, %v955
        %v957 = vpop.f32.mrb[0].mxu0
        %958 = vdwg.mxu0
        %v959 = vld [vmem:[#allocation18] sm:$0x1]
        %v961 = vlaneseq
        %v962 = vshrl.u32 %v961, 7
        %v963 = vsub.s32 0, %v962
        %v964 = vrot.slane %v959, %v963
        %v966 = vadd.f32 %v956, %v964
        %v967 = vxor.u32 %v966, 2147483648
        %v968 = vmul.f32 %v967, 1.442695
        %v969 = vpow.pop %v968
        %v970 = vadd.f32 %v969, 1.0
        %v971 = vrcp.pop %v970
        %v972 = vmul.f32 1.0, %v971
        %v973 = vld [vmem:[#allocation11] sm:$0xff]
        %v974 = vld [vmem:[#allocation11 + $0x8] sm:$0xff]
        %v975 = vld [vmem:[#allocation11 + $0x10] sm:$0xff]
        %v976 = vld [vmem:[#allocation11 + $0x18] sm:$0xff]
        %v977 = vld [vmem:[#allocation20] sm:$0x1]
        %v979 = vlaneseq
        %v980 = vshrl.u32 %v979, 7
        %v981 = vsub.s32 0, %v980
        %v982 = vrot.slane %v977, %v981
        %984 = vmatprep.subr.mxu0 0.0
        %985 = vmatpush1.msra.mxu0 %v973
        %986 = vmatprep.subr.mxu0 0.0
        %987 = vmatpush1.msra.mxu0 %v974
        %988 = vmatprep.subr.mxu0 0.0
        %989 = vmatpush1.msra.mxu0 %v975
        %990 = vmatprep.subr.mxu0 0.0
        %991 = vmatpush1.msra.mxu0 %v976
        %992 = vmatprep.subr.mxu0 0.0
        %993 = vmatpush1.msra.mxu0 0.0
        %994 = vmatprep.subr.mxu0 0.0
        %995 = vmatpush1.msra.mxu0 0.0
        %996 = vmatprep.subr.mxu0 0.0
        %997 = vmatpush1.msra.mxu0 0.0
        %998 = vmatprep.subr.mxu0 0.0
        %999 = vmatpush1.msra.mxu0 0.0
        %1000 = vmatprep.subr.mxu0 0.0
        %1001 = vmatpush1.msra.mxu0 0.0
        %1002 = vmatprep.subr.mxu0 0.0
        %1003 = vmatpush1.msra.mxu0 0.0
        %1004 = vmatprep.subr.mxu0 0.0
        %1005 = vmatpush1.msra.mxu0 0.0
        %1006 = vmatprep.subr.mxu0 0.0
        %1007 = vmatpush1.msra.mxu0 0.0
        %1008 = vmatprep.subr.mxu0 0.0
        %1009 = vmatpush1.msra.mxu0 0.0
        %1010 = vmatprep.subr.mxu0 0.0
        %1011 = vmatpush1.msra.mxu0 0.0
        %1012 = vmatprep.subr.mxu0 0.0
        %1013 = vmatpush1.msra.mxu0 0.0
        %1014 = vmatprep.subr.mxu0 0.0
        %1015 = vmatpush1.msra.mxu0 0.0
        %1016 = vmatprep.subr.mxu0 0.0
        %1017 = vmatpush1.msra.mxu0 0.0
        %1018 = vmatprep.subr.mxu0 0.0
        %1019 = vmatpush1.msra.mxu0 0.0
        %1020 = vmatprep.subr.mxu0 0.0
        %1021 = vmatpush1.msra.mxu0 0.0
        %1022 = vmatprep.subr.mxu0 0.0
        %1023 = vmatpush1.msra.mxu0 0.0
        %1024 = vmatprep.subr.mxu0 0.0
        %1025 = vmatpush1.msra.mxu0 0.0
        %1026 = vmatprep.subr.mxu0 0.0
        %1027 = vmatpush1.msra.mxu0 0.0
        %1028 = vmatprep.subr.mxu0 0.0
        %1029 = vmatpush1.msra.mxu0 0.0
        %1030 = vmatprep.subr.mxu0 0.0
        %1031 = vmatpush1.msra.mxu0 0.0
        %1032 = vmatprep.subr.mxu0 0.0
        %1033 = vmatpush1.msra.mxu0 0.0
        %1034 = vmatprep.subr.mxu0 0.0
        %1035 = vmatpush1.msra.mxu0 0.0
        %1036 = vmatprep.subr.mxu0 0.0
        %1037 = vmatpush1.msra.mxu0 0.0
        %1038 = vmatprep.subr.mxu0 0.0
        %1039 = vmatpush1.msra.mxu0 0.0
        %1040 = vmatprep.subr.mxu0 0.0
        %1041 = vmatpush1.msra.mxu0 0.0
        %1042 = vmatprep.subr.mxu0 0.0
        %1043 = vmatpush1.msra.mxu0 0.0
        %1044 = vmatprep.subr.mxu0 0.0
        %1045 = vmatpush1.msra.mxu0 0.0
        %1046 = vmatprep.subr.mxu0 0.0
        %1047 = vmatpush1.msra.mxu0 0.0
        %1048 = vmatprep.mubr.f32.mxu0 0.0
        %1049 = vmatmul.mubr.f32.gmra.mrb[0].mxu0 %v725
        %v1050 = vpop.f32.mrb[0].mxu0
        %v1051 = vadd.f32 %v982, %v1050
        %v1052 = vpop.f32.mrb[0].mxu0
        %1053 = vdwg.mxu0
        %v1054 = vld [vmem:[#allocation15] sm:$0xff]
        %v1055 = vld [vmem:[#allocation15 + $0x8] sm:$0xff]
        %v1056 = vld [vmem:[#allocation15 + $0x10] sm:$0xff]
        %v1057 = vld [vmem:[#allocation15 + $0x18] sm:$0xff]
        %v1058 = vld [vmem:[#allocation21] sm:$0x1]
        %v1060 = vlaneseq
        %v1061 = vshrl.u32 %v1060, 7
        %v1062 = vsub.s32 0, %v1061
        %v1063 = vrot.slane %v1058, %v1062
        %1065 = vmatprep.subr.mxu0 0.0
        %1066 = vmatpush1.msra.mxu0 %v1054
        %1067 = vmatprep.subr.mxu0 0.0
        %1068 = vmatpush1.msra.mxu0 %v1055
        %1069 = vmatprep.subr.mxu0 0.0
        %1070 = vmatpush1.msra.mxu0 %v1056
        %1071 = vmatprep.subr.mxu0 0.0
        %1072 = vmatpush1.msra.mxu0 %v1057
        %1073 = vmatprep.subr.mxu0 0.0
        %1074 = vmatpush1.msra.mxu0 0.0
        %1075 = vmatprep.subr.mxu0 0.0
        %1076 = vmatpush1.msra.mxu0 0.0
        %1077 = vmatprep.subr.mxu0 0.0
        %1078 = vmatpush1.msra.mxu0 0.0
        %1079 = vmatprep.subr.mxu0 0.0
        %1080 = vmatpush1.msra.mxu0 0.0
        %1081 = vmatprep.subr.mxu0 0.0
        %1082 = vmatpush1.msra.mxu0 0.0
        %1083 = vmatprep.subr.mxu0 0.0
        %1084 = vmatpush1.msra.mxu0 0.0
        %1085 = vmatprep.subr.mxu0 0.0
        %1086 = vmatpush1.msra.mxu0 0.0
        %1087 = vmatprep.subr.mxu0 0.0
        %1088 = vmatpush1.msra.mxu0 0.0
        %1089 = vmatprep.subr.mxu0 0.0
        %1090 = vmatpush1.msra.mxu0 0.0
        %1091 = vmatprep.subr.mxu0 0.0
        %1092 = vmatpush1.msra.mxu0 0.0
        %1093 = vmatprep.subr.mxu0 0.0
        %1094 = vmatpush1.msra.mxu0 0.0
        %1095 = vmatprep.subr.mxu0 0.0
        %1096 = vmatpush1.msra.mxu0 0.0
        %1097 = vmatprep.subr.mxu0 0.0
        %1098 = vmatpush1.msra.mxu0 0.0
        %1099 = vmatprep.subr.mxu0 0.0
        %1100 = vmatpush1.msra.mxu0 0.0
        %1101 = vmatprep.subr.mxu0 0.0
        %1102 = vmatpush1.msra.mxu0 0.0
        %1103 = vmatprep.subr.mxu0 0.0
        %1104 = vmatpush1.msra.mxu0 0.0
        %1105 = vmatprep.subr.mxu0 0.0
        %1106 = vmatpush1.msra.mxu0 0.0
        %1107 = vmatprep.subr.mxu0 0.0
        %1108 = vmatpush1.msra.mxu0 0.0
        %1109 = vmatprep.subr.mxu0 0.0
        %1110 = vmatpush1.msra.mxu0 0.0
        %1111 = vmatprep.subr.mxu0 0.0
        %1112 = vmatpush1.msra.mxu0 0.0
        %1113 = vmatprep.subr.mxu0 0.0
        %1114 = vmatpush1.msra.mxu0 0.0
        %1115 = vmatprep.subr.mxu0 0.0
        %1116 = vmatpush1.msra.mxu0 0.0
        %1117 = vmatprep.subr.mxu0 0.0
        %1118 = vmatpush1.msra.mxu0 0.0
        %1119 = vmatprep.subr.mxu0 0.0
        %1120 = vmatpush1.msra.mxu0 0.0
        %1121 = vmatprep.subr.mxu0 0.0
        %1122 = vmatpush1.msra.mxu0 0.0
        %1123 = vmatprep.subr.mxu0 0.0
        %1124 = vmatpush1.msra.mxu0 0.0
        %1125 = vmatprep.subr.mxu0 0.0
        %1126 = vmatpush1.msra.mxu0 0.0
        %1127 = vmatprep.subr.mxu0 0.0
        %1128 = vmatpush1.msra.mxu0 0.0
        %1129 = vmatprep.mubr.f32.mxu0 0.0
        %1130 = vmatmul.mubr.f32.gmra.mrb[0].mxu0 %v652
        %v1131 = vpop.f32.mrb[0].mxu0
        %v1132 = vadd.f32 %v1063, %v1131
        %v1133 = vpop.f32.mrb[0].mxu0
        %1134 = vdwg.mxu0
        %v1135 = vmul.f32 %v810, %v1132
        %v1136 = vadd.f32 %v1051, %v1135
        %v1137 = vtanh.pop %v1136
        %v1138 = vsub.f32 1.0, %v972
        %v1139 = vmul.f32 %v1138, %v1137
        %v1140 = vmul.f32 %v972, %v641
        %v1141 = vadd.f32 %v1139, %v1140
        %v1142 = vld [vmem:[#allocation3] sm:$0xff]
        %v1143 = vstv %s43
        %vm1144 = vcmp.gt.s32.totalorder %v1142, %v1143
        %v1145 = vsel %vm1144, 1, 0
        %1146 = vset.pattern.permute.xlu0 0
        %1147 = vperm.xlu0 %1146, %v1145
        %v1148 = vpop.permute.xlu0 %1147
        %vm1149 = vcmp.eq.s32.totalorder %v1148, 1
        %v1150 = vsel %vm1149, %v1141, %v641
        %1151 = vst.msk [vmem:[#allocation2] sm:$0xff] %vm650, %v1150
        %v1152 = vsel %vm1149, %v1141, 0.0
        %1153 = vst.msk [vmem:[%s631] sm:$0xff] %vm650, %v1152
        %p1154 = scmp.eq.s32.totalorder %s43, 13
        // Predicated region
        $region121: #{tpu_custom_call.1} parent=67 // pred_check
          %p1155 = pneg %p1154
        $region122: #{tpu_custom_call.1} parent=67 // pred_check_branch
          %1157 = sbr.rel (%p1155) target = $region124
        $region123: #{tpu_custom_call.1} parent=67 // pred_region
          %1158 = vst.msk [vmem:[#allocation24] sm:$0xff] %vm650, %v1150
        $region124: #{tpu_custom_call.1} parent=67 // pred_fallthru
          _
        %s1159 = sand.u32 %s324, 1
        %s1160 = scalar_lea.sflag [#allocation5], %s1159
        %s1161 = sand.u32 %s324, 1
        %s1162 = smul.addr %s1161, 8
        %s1163 = scalar_lea.vmem [#allocation23], %s1162
        // Predicated region
        $region125: #{tpu_custom_call.1} parent=67 // pred_check
          %p1164 = pneg %p334
        $region126: #{tpu_custom_call.1} parent=67 // pred_check_branch
          %1166 = sbr.rel (%p1164) target = $region128
        $region127: #{tpu_custom_call.1} parent=67 // pred_region
          %s1168 = ssub.s32 128, 128
          %1169 = vsyncadd %s1160, %s1168
          %s1170 = sadd.s32 %s42, %s43
          %s1171 = smul.addr %s1170, 128
          %s1172 = scalar_lea.hbm %s12, %s1171
          %s1174 = sshll.u32 %s1163, 4
          %s1175 = int_to_ptr.vmem [resolvable:$true] %s1174
          %1177 = dma.vmem_to_hbm [thread:$0]  %s1175, 128, %s1172, %s1160
        $region128: #{tpu_custom_call.1} parent=67 // pred_fallthru
          _
        // Predicated region
        $region129: #{tpu_custom_call.1} parent=67 // pred_check
          %p1178 = pneg %p360
        $region130: #{tpu_custom_call.1} parent=67 // pred_check_branch
          %1180 = sbr.rel (%p1178) target = $region132
        $region131: #{tpu_custom_call.1} parent=67 // pred_region
          %s1182 = ssub.s32 128, 128
          %1183 = vsyncadd [#allocation25], %s1182
          %s1184 = smul.addr %s42, 128
          %s1185 = scalar_lea.hbm %s13, %s1184
          %s1187 = sshll.u32 [#allocation24], 4
          %s1188 = int_to_ptr.vmem [resolvable:$true] %s1187
          %1190 = dma.vmem_to_hbm [thread:$0]  %s1188, 128, %s1185, [#allocation25]
        $region132: #{tpu_custom_call.1} parent=67 // pred_fallthru
          _
        // Predicated region
        $region133: #{tpu_custom_call.1} parent=67 // pred_check
          %p1191 = pneg %p360
        $region134: #{tpu_custom_call.1} parent=67 // pred_check_branch
          %1193 = sbr.rel (%p1191) target = $region136
        $region135: #{tpu_custom_call.1} parent=67 // pred_region
          %1194 = dma.done [#allocation25], 128
        $region136: #{tpu_custom_call.1} parent=67 // pred_fallthru
          _
      $region68: #{tpu_custom_call.1} parent=5 // pred_fallthru
        _
      %p1195 = scmp.le.s32.totalorder 2, %s33
      // Predicated region
      $region137: #{tpu_custom_call.1} parent=5 // pred_check
        %p1196 = pneg %p1195
      $region138: #{tpu_custom_call.1} parent=5 // pred_check_branch
        %1198 = sbr.rel (%p1196) target = $region140
      $region139: #{tpu_custom_call.1} parent=5 // pred_region
        %s1199 = ssub.s32 %s33, 2
        // Predicated region
        $region141: #{tpu_custom_call.1} parent=139 // pred_check
          %p1200 = pneg %p340
        $region142: #{tpu_custom_call.1} parent=139 // pred_check_branch
          %1202 = sbr.rel (%p1200) target = $region144
        $region143: #{tpu_custom_call.1} parent=139 // pred_region
          %s1203 = sand.u32 %s325, 1
          %s1204 = scalar_lea.sflag [#allocation5], %s1203
          %s1205 = sand.u32 %s325, 1
          %s1206 = smul.addr %s1205, 8
          %s1207 = scalar_lea.vmem [#allocation23], %s1206
          %1208 = dma.done %s1204, 128
        $region144: #{tpu_custom_call.1} parent=139 // pred_fallthru
          _
      $region140: #{tpu_custom_call.1} parent=5 // pred_fallthru
        _
    $region6: #{tpu_custom_call.1} parent=1 // loop_footer
      %s37 = sadd.s32 1, %s33
    $region7: #{tpu_custom_call.1} parent=1 // loop_footer_branch
      %32 = sbr.rel target = $region3
    $region8: #{tpu_custom_call.1} parent=1 // loop_exit
      _
    %1209 = vsyncpa [#allocation4], 1
    %s1210 = scalar_lea.sflag [#allocation4], 1
    %1211 = vsyncpa %s1210, 1
    %1212 = vsyncpa [#allocation7], 1
    %s1213 = scalar_lea.sflag [#allocation7], 1
    %1214 = vsyncpa %s1213, 1
    %1215 = vsyncpa [#allocation10], 1
    %1216 = vsyncpa [#allocation13], 1
    %1217 = vsyncpa [#allocation16], 1
    %1218 = vsyncpa [#allocation19], 1
    %1219 = vsyncpa [#allocation22], 1
    %1220 = vsyncpa [#allocation5], 1
    %s1221 = scalar_lea.sflag [#allocation5], 1
    %1222 = vsyncpa %s1221, 1
    %1223 = vsyncpa [#allocation25], 1

</llo_original>
